<compile_context>
chip_gen: v7x
topology: tpu7x:2x2x1
jax: 0.10.0
libtpu: 0.0.40
codegen_flags: <defaults>
</compile_context>

<pallas_src>
import functools

import jax
import jax.numpy as jnp
from jax import lax
from jax.experimental import pallas as pl
from jax.experimental.pallas import tpu as pltpu

DIM_IN = 64        # module input/output feature dim
DIM_HID = 256      # hidden feature dim
F_COEFFI = -1.0

# Packed ("pair-row") dims: two 64-wide batch rows share one 128-lane row.
P_IN = 2 * DIM_IN      # 128
P_HID = 2 * DIM_HID    # 512


def _round_up(n, m):
    return ((n + m - 1) // m) * m


def _cdiv(a, b):
    return (a + b - 1) // b


# ---------------------------------------------------------------------------
# In-kernel math: one derivative evaluation f(t, x) in packed-pair space.
# t is ignored (ConcatFC.forward ignores it).  f_coeffi is already folded into
# the bf16 weights and f32 biases, so f(x) = sin(sin(sin(xW1+b1)W2+b2)W3+b3).
# ---------------------------------------------------------------------------
def _mlp_packed(x_f32, w1_ref, b1_ref, w2_ref, b2_ref, w3_ref, b3_ref, act_dtype):
    h = jnp.dot(x_f32.astype(jnp.bfloat16), w1_ref[...],
                preferred_element_type=jnp.float32) + b1_ref[...]
    h = jnp.sin(h.astype(act_dtype))
    h = jnp.dot(h.astype(jnp.bfloat16), w2_ref[...],
                preferred_element_type=jnp.float32) + b2_ref[...]
    h = jnp.sin(h.astype(act_dtype))
    h = jnp.dot(h.astype(jnp.bfloat16), w3_ref[...],
                preferred_element_type=jnp.float32) + b3_ref[...]
    return jnp.sin(h.astype(act_dtype))


def _fwd_kernel(x_ref, w1, b1, w2, b2, w3, b3, o_ref, *, act_dtype):
    out = _mlp_packed(x_ref[...].astype(jnp.float32),
                      w1, b1, w2, b2, w3, b3, act_dtype)
    o_ref[...] = out.astype(o_ref.dtype)


def _euler_kernel(x_ref, w1, b1, w2, b2, w3, b3, o_ref, *,
                  num_steps, dt, act_dtype):
    # The explicit-Euler time loop runs entirely inside the kernel: the grid is a
    # batch-tile axis only, so "parallel" is safe (the sequential dependence lives
    # in the fori_loop carry), weights are DMA'd once, and there is no per-step
    # pipeline overhead or scratch round-trip.
    x0 = x_ref[...].astype(jnp.float32)

    def body(_, x):
        f = _mlp_packed(x, w1, b1, w2, b2, w3, b3, act_dtype)
        return x + dt * f.astype(jnp.float32)

    x_final = lax.fori_loop(0, num_steps, body, x0)
    o_ref[...] = x_final.astype(o_ref.dtype)


# ---------------------------------------------------------------------------
# Parameter prep: fold f_coeffi, build block-diagonal "pair" weights, cast the
# weights to bf16 once (biases stay f32).  Weights are (in_features, out_features)
# so the kernel computes x @ W + b.
# ---------------------------------------------------------------------------
def prepare_params(w1, b1, w2, b2, w3, b3):
    def prep(w, b):
        w = F_COEFFI * jnp.asarray(w, jnp.float32)
        b = F_COEFFI * jnp.asarray(b, jnp.float32)
        din, dout = w.shape
        wp = jnp.zeros((2 * din, 2 * dout), jnp.float32)
        wp = wp.at[:din, :dout].set(w).at[din:, dout:].set(w)
        bp = jnp.concatenate([b, b]).reshape(1, 2 * dout)
        return wp.astype(jnp.bfloat16), bp.astype(jnp.float32)

    p1 = prep(w1, b1)
    p2 = prep(w2, b2)
    p3 = prep(w3, b3)
    return p1 + p2 + p3  # (w1, b1, w2, b2, w3, b3), packed


# ---------------------------------------------------------------------------
# Tiling / packing helpers.
# ---------------------------------------------------------------------------
def _pick_tiling(batch, max_tile_rows):
    """Pad the batch to a multiple of 16 rows (so packed rows are a multiple of the
    8-sublane granule; <= 15 rows of padding) and pick a packed-row tile.  A batch
    that fits one tile is still split in two (when >= 32 packed rows) so v7x's two
    TensorCores both get a tile on the "parallel" grid axis."""
    bp = _round_up(max(batch, 1), 16)
    rows = bp // 2
    if rows <= max_tile_rows:
        tile_rows = rows // 2 if (rows % 16 == 0 and rows >= 32) else rows
    else:
        tile_rows = max_tile_rows
    return bp, rows, tile_rows, _cdiv(rows, tile_rows)


def _pack(x, bp):
    b = x.shape[0]
    if bp != b:
        x = jnp.pad(x, ((0, bp - b), (0, 0)))
    # Free row-major view: packed row i = [row 2i | row 2i+1]  -> lane-dense I/O.
    return x.reshape(bp // 2, P_IN)


def _keep(shape):
    # Constant index map -> block stays resident in VMEM across grid iterations.
    return pl.BlockSpec(shape, lambda i: (0,) * len(shape))


# ---------------------------------------------------------------------------
# Wrapper 1: single derivative evaluation == ODEfunc_mlp.forward(t, x).
# ---------------------------------------------------------------------------
def odefunc_mlp(x, params, *, max_tile_rows=256, act_dtype=jnp.float32):
    w1, b1, w2, b2, w3, b3 = params
    batch = x.shape[0]
    bp, rows, tile_rows, grid_b = _pick_tiling(batch, max_tile_rows)
    xp = _pack(x, bp)

    out = pl.pallas_call(
        functools.partial(_fwd_kernel, act_dtype=act_dtype),
        out_shape=jax.ShapeDtypeStruct((rows, P_IN), x.dtype),
        grid=(grid_b,),
        in_specs=[
            pl.BlockSpec((tile_rows, P_IN), lambda i: (i, 0)),
            _keep((P_IN, P_HID)), _keep((1, P_HID)),
            _keep((P_HID, P_HID)), _keep((1, P_HID)),
            _keep((P_HID, P_IN)), _keep((1, P_IN)),
        ],
        out_specs=pl.BlockSpec((tile_rows, P_IN), lambda i: (i, 0)),
        compiler_params=pltpu.CompilerParams(
            dimension_semantics=("parallel",)),
    )(xp, w1, b1, w2, b2, w3, b3)
    return out.reshape(bp, DIM_IN)[:batch]


# ---------------------------------------------------------------------------
# Wrapper 2: explicit-Euler integration, whole time loop inside one pallas_call.
# NOTE: weights run in bf16 (optionally activations too via act_dtype); the
# ~1e-3 relative error per evaluation compounds over integration steps.
# ---------------------------------------------------------------------------
def odefunc_mlp_euler(x, params, *, num_steps, dt, max_tile_rows=256,
                      act_dtype=jnp.float32):
    if num_steps <= 0:  # empty integration: output is the input (avoid undefined output)
        return x

    w1, b1, w2, b2, w3, b3 = params
    batch = x.shape[0]
    bp, rows, tile_rows, grid_b = _pick_tiling(batch, max_tile_rows)
    xp = _pack(x, bp)

    out = pl.pallas_call(
        functools.partial(_euler_kernel, num_steps=int(num_steps),
                          dt=float(dt), act_dtype=act_dtype),
        out_shape=jax.ShapeDtypeStruct((rows, P_IN), x.dtype),
        grid=(grid_b,),
        in_specs=[
            pl.BlockSpec((tile_rows, P_IN), lambda i: (i, 0)),
            _keep((P_IN, P_HID)), _keep((1, P_HID)),
            _keep((P_HID, P_HID)), _keep((1, P_HID)),
            _keep((P_HID, P_IN)), _keep((1, P_IN)),
        ],
        out_specs=pl.BlockSpec((tile_rows, P_IN), lambda i: (i, 0)),
        compiler_params=pltpu.CompilerParams(
            dimension_semantics=("parallel",)),
    )(xp, w1, b1, w2, b2, w3, b3)
    return out.reshape(bp, DIM_IN)[:batch]


# ---------------------------------------------------------------------------
# References / init.
# ---------------------------------------------------------------------------
def ref_forward(x, raw_params):
    """Pure-JAX reference with the SAME precision recipe as the kernel
    (bf16 weights, f32 accumulation, f32 activations)."""
    def layer(h, w, b):
        z = jnp.dot(h.astype(jnp.bfloat16), (F_COEFFI * w).astype(jnp.bfloat16),
                    preferred_element_type=jnp.float32) + (F_COEFFI * b)
        return jnp.sin(z)

    (w1, b1), (w2, b2), (w3, b3) = raw_params
    h = layer(x.astype(jnp.float32), w1, b1)
    h = layer(h, w2, b2)
    return layer(h, w3, b3)


def ref_forward_f32(x, raw_params):
    """Original full-f32 PyTorch math."""
    (w1, b1), (w2, b2), (w3, b3) = raw_params
    h = jnp.sin(F_COEFFI * (x @ w1 + b1))
    h = jnp.sin(F_COEFFI * (h @ w2 + b2))
    return jnp.sin(F_COEFFI * (h @ w3 + b3))


def init_linear_params(key, fan_in, fan_out):
    # Mimics PyTorch nn.Linear default init (uniform +/- 1/sqrt(fan_in)).
    kw, kb = jax.random.split(key)
    bound = 1.0 / (fan_in ** 0.5)
    w = jax.random.uniform(kw, (fan_in, fan_out), jnp.float32, -bound, bound)
    b = jax.random.uniform(kb, (fan_out,), jnp.float32, -bound, bound)
    return w, b


if __name__ == "__main__":
    key = jax.random.PRNGKey(0)
    kx, kx2, k1, k2, k3 = jax.random.split(key, 5)

    w1, b1 = init_linear_params(k1, DIM_IN, DIM_HID)
    w2, b2 = init_linear_params(k2, DIM_HID, DIM_HID)
    w3, b3 = init_linear_params(k3, DIM_HID, DIM_IN)
    raw = ((w1, b1), (w2, b2), (w3, b3))
    params = prepare_params(w1, b1, w2, b2, w3, b3)

    # --- 1) single derivative evaluation == ODEfunc_mlp.forward(t, x) ---
    B = 8
    x = jax.random.normal(kx, (B, DIM_IN), jnp.float32)
    out = jax.block_until_ready(odefunc_mlp(x, params))
    assert out.shape == (B, DIM_IN)

    ref = ref_forward(x, raw)
    assert jnp.allclose(out, ref, atol=3e-3, rtol=3e-3), \
        float(jnp.max(jnp.abs(out - ref)))
    # Sanity check vs the original full-f32 math (bf16 weights -> loose tolerance).
    ref32 = ref_forward_f32(x, raw)
    assert jnp.allclose(out, ref32, atol=5e-2, rtol=5e-2), \
        float(jnp.max(jnp.abs(out - ref32)))

    # Non-multiple-of-16 batch -> exercises padding + a 2-tile "parallel" grid.
    B2 = 50
    x2 = jax.random.normal(kx2, (B2, DIM_IN), jnp.float32)
    out2 = jax.block_until_ready(odefunc_mlp(x2, params))
    ref2 = ref_forward(x2, raw)
    assert out2.shape == (B2, DIM_IN)
    assert jnp.allclose(out2, ref2, atol=3e-3, rtol=3e-3), \
        float(jnp.max(jnp.abs(out2 - ref2)))

    # --- 2) in-kernel explicit-Euler time loop ---
    NSTEPS, DT = 16, 0.05
    out_euler = jax.block_until_ready(
        odefunc_mlp_euler(x, params, num_steps=NSTEPS, dt=DT))
    x_ref = x
    for _ in range(NSTEPS):
        x_ref = x_ref + DT * ref_forward(x_ref, raw)
    assert jnp.allclose(out_euler, x_ref, atol=1e-2, rtol=1e-2), \
        float(jnp.max(jnp.abs(out_euler - x_ref)))

    # num_steps == 0 guard: output == input.
    out_zero = odefunc_mlp_euler(x, params, num_steps=0, dt=DT)
    assert jnp.allclose(out_zero, x)

    print("KERNEL_OK")
</pallas_src>

<mosaic_0001>
module attributes {stable_mosaic.version = 11 : i64} {
  func.func @_fwd_kernel(%arg0: i32, %arg1: memref<8x128xf32, #tpu.memory_space<vmem>>, %arg2: memref<128x512xbf16, #tpu.memory_space<vmem>>, %arg3: memref<1x512xf32, #tpu.memory_space<vmem>>, %arg4: memref<512x512xbf16, #tpu.memory_space<vmem>>, %arg5: memref<1x512xf32, #tpu.memory_space<vmem>>, %arg6: memref<512x128xbf16, #tpu.memory_space<vmem>>, %arg7: memref<1x128xf32, #tpu.memory_space<vmem>>, %arg8: memref<8x128xf32, #tpu.memory_space<vmem>>) attributes {dimension_semantics = [#tpu.dimension_semantics<parallel>], iteration_bounds = array<i64: 1>, scalar_prefetch = 0 : i64, scratch_operands = 0 : i64, tpu.core_type = #tpu.core_type<tc>, window_params = [{transform_indices = @transform_0, window_bounds = array<i64: 8, 128>}, {pipeline_mode = #tpu.pipeline_mode<synchronous>, transform_indices = @transform_1, window_bounds = array<i64: 128, 512>}, {pipeline_mode = #tpu.pipeline_mode<synchronous>, transform_indices = @transform_2, window_bounds = array<i64: 1, 512>}, {pipeline_mode = #tpu.pipeline_mode<synchronous>, transform_indices = @transform_3, window_bounds = array<i64: 512, 512>}, {pipeline_mode = #tpu.pipeline_mode<synchronous>, transform_indices = @transform_4, window_bounds = array<i64: 1, 512>}, {pipeline_mode = #tpu.pipeline_mode<synchronous>, transform_indices = @transform_5, window_bounds = array<i64: 512, 128>}, {pipeline_mode = #tpu.pipeline_mode<synchronous>, transform_indices = @transform_6, window_bounds = array<i64: 1, 128>}, {transform_indices = @transform_7, window_bounds = array<i64: 8, 128>}]} {
    %c0 = arith.constant 0 : index
    %c0_0 = arith.constant 0 : index
    %0 = vector.load %arg1[%c0, %c0_0] : memref<8x128xf32, #tpu.memory_space<vmem>>, vector<8x128xf32>
    %1 = arith.truncf %0 : vector<8x128xf32> to vector<8x128xbf16>
    %c0_1 = arith.constant 0 : index
    %c0_2 = arith.constant 0 : index
    %2 = vector.load %arg2[%c0_1, %c0_2] : memref<128x512xbf16, #tpu.memory_space<vmem>>, vector<128x512xbf16>
    %cst = arith.constant dense<0.000000e+00> : vector<8x512xf32>
    %3 = tpu.matmul %1, %2, %cst {dimension_numbers = #tpu.dot_dimension_numbers<[1], [0], [0], [1], [0, 0, 1, 1], [], []>} : vector<8x128xbf16>, vector<128x512xbf16>, vector<8x512xf32> -> vector<8x512xf32>
    %c0_3 = arith.constant 0 : index
    %c0_4 = arith.constant 0 : index
    %4 = vector.load %arg3[%c0_3, %c0_4] : memref<1x512xf32, #tpu.memory_space<vmem>>, vector<1x512xf32>
    %5 = vector.broadcast %4 : vector<1x512xf32> to vector<8x512xf32>
    %6 = arith.addf %3, %5 : vector<8x512xf32>
    %7 = math.sin %6 : vector<8x512xf32>
    %8 = arith.truncf %7 : vector<8x512xf32> to vector<8x512xbf16>
    %c0_5 = arith.constant 0 : index
    %c0_6 = arith.constant 0 : index
    %9 = vector.load %arg4[%c0_5, %c0_6] : memref<512x512xbf16, #tpu.memory_space<vmem>>, vector<512x512xbf16>
    %cst_7 = arith.constant dense<0.000000e+00> : vector<8x512xf32>
    %10 = tpu.matmul %8, %9, %cst_7 {dimension_numbers = #tpu.dot_dimension_numbers<[1], [0], [0], [1], [0, 0, 1, 1], [], []>} : vector<8x512xbf16>, vector<512x512xbf16>, vector<8x512xf32> -> vector<8x512xf32>
    %c0_8 = arith.constant 0 : index
    %c0_9 = arith.constant 0 : index
    %11 = vector.load %arg5[%c0_8, %c0_9] : memref<1x512xf32, #tpu.memory_space<vmem>>, vector<1x512xf32>
    %12 = vector.broadcast %11 : vector<1x512xf32> to vector<8x512xf32>
    %13 = arith.addf %10, %12 : vector<8x512xf32>
    %14 = math.sin %13 : vector<8x512xf32>
    %15 = arith.truncf %14 : vector<8x512xf32> to vector<8x512xbf16>
    %c0_10 = arith.constant 0 : index
    %c0_11 = arith.constant 0 : index
    %16 = vector.load %arg6[%c0_10, %c0_11] : memref<512x128xbf16, #tpu.memory_space<vmem>>, vector<512x128xbf16>
    %cst_12 = arith.constant dense<0.000000e+00> : vector<8x128xf32>
    %17 = tpu.matmul %15, %16, %cst_12 {dimension_numbers = #tpu.dot_dimension_numbers<[1], [0], [0], [1], [0, 0, 1, 1], [], []>} : vector<8x512xbf16>, vector<512x128xbf16>, vector<8x128xf32> -> vector<8x128xf32>
    %c0_13 = arith.constant 0 : index
    %c0_14 = arith.constant 0 : index
    %18 = vector.load %arg7[%c0_13, %c0_14] : memref<1x128xf32, #tpu.memory_space<vmem>>, vector<1x128xf32>
    %19 = vector.broadcast %18 : vector<1x128xf32> to vector<8x128xf32>
    %20 = arith.addf %17, %19 : vector<8x128xf32>
    %21 = math.sin %20 : vector<8x128xf32>
    %c0_15 = arith.constant 0 : index
    %c0_16 = arith.constant 0 : index
    %22 = vector.load %arg8[%c0_15, %c0_16] : memref<8x128xf32, #tpu.memory_space<vmem>>, vector<8x128xf32>
    tpu.vector_store %arg8[%c0_15, %c0_16], %21 {strides = array<i32>} : memref<8x128xf32, #tpu.memory_space<vmem>>, vector<8x128xf32>,
    return
  }
  func.func @transform_0(%arg0: i32) -> (i32, i32) {
    %c0_i32 = arith.constant 0 : i32
    %c0_i32_0 = arith.constant 0 : i32
    return %arg0, %c0_i32 : i32, i32
  }
  func.func @transform_1(%arg0: i32) -> (i32, i32) {
    %c0_i32 = arith.constant 0 : i32
    %c0_i32_0 = arith.constant 0 : i32
    %c0_i32_1 = arith.constant 0 : i32
    return %c0_i32, %c0_i32_0 : i32, i32
  }
  func.func @transform_2(%arg0: i32) -> (i32, i32) {
    %c0_i32 = arith.constant 0 : i32
    %c0_i32_0 = arith.constant 0 : i32
    %c0_i32_1 = arith.constant 0 : i32
    return %c0_i32, %c0_i32_0 : i32, i32
  }
  func.func @transform_3(%arg0: i32) -> (i32, i32) {
    %c0_i32 = arith.constant 0 : i32
    %c0_i32_0 = arith.constant 0 : i32
    %c0_i32_1 = arith.constant 0 : i32
    return %c0_i32, %c0_i32_0 : i32, i32
  }
  func.func @transform_4(%arg0: i32) -> (i32, i32) {
    %c0_i32 = arith.constant 0 : i32
    %c0_i32_0 = arith.constant 0 : i32
    %c0_i32_1 = arith.constant 0 : i32
    return %c0_i32, %c0_i32_0 : i32, i32
  }
  func.func @transform_5(%arg0: i32) -> (i32, i32) {
    %c0_i32 = arith.constant 0 : i32
    %c0_i32_0 = arith.constant 0 : i32
    %c0_i32_1 = arith.constant 0 : i32
    return %c0_i32, %c0_i32_0 : i32, i32
  }
  func.func @transform_6(%arg0: i32) -> (i32, i32) {
    %c0_i32 = arith.constant 0 : i32
    %c0_i32_0 = arith.constant 0 : i32
    %c0_i32_1 = arith.constant 0 : i32
    return %c0_i32, %c0_i32_0 : i32, i32
  }
  func.func @transform_7(%arg0: i32) -> (i32, i32) {
    %c0_i32 = arith.constant 0 : i32
    %c0_i32_0 = arith.constant 0 : i32
    return %arg0, %c0_i32 : i32, i32
  }
}

</mosaic_0001>

<llo_original>
// kernel: tpu_custom_call.1
$region0: #{tpu_custom_call.1}
  #allocation0 [shape = 'u32[]', space=smem, size = 0x4, offset = 0x4, fixed_abs, tag = 'smem constant byte address 0x4 - core index']
  #allocation1 [shape = 'u32[144,128]{1,0:T(1,128)}', space=vmem, size = 0x12000, scoped, tag = 'internal scratch']
  %s0 = inlined_call_operand.hbm [shape: f32[8,128], index: 0, kind: input, shape index: {}]
  %s1 = inlined_call_operand.hbm [shape: bf16[128,512], index: 1, kind: input, shape index: {}]
  %s2 = inlined_call_operand.vmem [shape: f32[1,512], index: 2, kind: input, shape index: {}]
  %s3 = inlined_call_operand.hbm [shape: bf16[512,512], index: 3, kind: input, shape index: {}]
  %s4 = inlined_call_operand.vmem [shape: f32[1,512], index: 4, kind: input, shape index: {}]
  %s5 = inlined_call_operand.hbm [shape: bf16[512,128], index: 5, kind: input, shape index: {}]
  %s6 = inlined_call_operand.vmem [shape: f32[1,128], index: 6, kind: input, shape index: {}]
  %s7 = inlined_call_operand.hbm [shape: f32[8,128], index: 7, kind: output, shape index: {}]
  %s8 = sld [smem:[#allocation0]]
  $region54: #{tpu_custom_call.1} parent=0
    _
  %s10 = ssub.s32 1, %s8
  %s11 = scalar_select 0, %s10, %s8
  $region1: #{tpu_custom_call.1} parent=0
    #allocation2 [shape = 'u8[4096]{0}', space=vmem, size = 0x1000, scoped, tag = 'input window, operand 0, single buffered']
    #allocation3 [shape = 's32[1]{0}', space=sflag, size = 0x4, scoped, tag = 'scoped memory for tpu_custom_call.1']
    #allocation4 [shape = 's32[1]{0}', space=sflag, size = 0x4, scoped, tag = 'scoped memory for tpu_custom_call.1']
    #allocation5 [shape = 'u8[131072]{0}', space=vmem, size = 0x20000, scoped, tag = 'input window, operand 1, single buffered']
    #allocation6 [shape = 's32[1]{0}', space=sflag, size = 0x4, scoped, tag = 'scoped memory for tpu_custom_call.1']
    #allocation7 [shape = 'u8[524288]{0}', space=vmem, size = 0x80000, scoped, tag = 'input window, operand 3, single buffered']
    #allocation8 [shape = 'u8[131072]{0}', space=vmem, size = 0x20000, scoped, tag = 'input window, operand 5, single buffered']
    #allocation9 [shape = 's32[1]{0}', space=sflag, size = 0x4, scoped, tag = 'scoped memory for tpu_custom_call.1']
    #allocation10 [shape = 'u8[4096]{0}', space=vmem, size = 0x1000, scoped, tag = 'output window, operand 0, single buffered']
    %12 = vsyncpa [#allocation3], 0
    %13 = vsyncpa [#allocation6], 0
    %14 = vsyncpa [#allocation9], 0
    %15 = vsyncpa [#allocation4], 0
    // Predicated region
    $region2: #{tpu_custom_call.1} parent=1 // pred_check
      _
    $region3: #{tpu_custom_call.1} parent=1 // pred_check_branch
      %17 = sbr.rel (0) target = $region5
    $region4: #{tpu_custom_call.1} parent=1 // pred_region
      %s19 = ssub.s32 128, 128
      %20 = vsyncadd [#allocation3], %s19
      %s22 = sshll.u32 [#allocation2], 4
      %s23 = int_to_ptr.vmem [resolvable:$true] %s22
      %25 = dma.hbm_to_vmem [thread:$0]  %s0, 128, %s23, [#allocation3]
    $region5: #{tpu_custom_call.1} parent=1 // pred_fallthru
      _
    // Predicated region
    $region6: #{tpu_custom_call.1} parent=1 // pred_check
      _
    $region7: #{tpu_custom_call.1} parent=1 // pred_check_branch
      %27 = sbr.rel (0) target = $region9
    $region8: #{tpu_custom_call.1} parent=1 // pred_region
      %s29 = ssub.s32 4096, 4096
      %30 = vsyncadd [#allocation6], %s29
      %s31 = sshll.u32 [#allocation5], 4
      %s32 = int_to_ptr.vmem [resolvable:$true] %s31
      %37 = dma.hbm_to_vmem [thread:$0]  %s1, 4096, %s32, [#allocation6], 256, 256, 16
    $region9: #{tpu_custom_call.1} parent=1 // pred_fallthru
      _
    // Predicated region
    $region10: #{tpu_custom_call.1} parent=1 // pred_check
      _
    $region11: #{tpu_custom_call.1} parent=1 // pred_check_branch
      %39 = sbr.rel (0) target = $region13
    $region12: #{tpu_custom_call.1} parent=1 // pred_region
      _
    $region13: #{tpu_custom_call.1} parent=1 // pred_fallthru
      _
    // Predicated region
    $region14: #{tpu_custom_call.1} parent=1 // pred_check
      _
    $region15: #{tpu_custom_call.1} parent=1 // pred_check_branch
      %41 = sbr.rel (0) target = $region17
    $region16: #{tpu_custom_call.1} parent=1 // pred_region
      %s43 = ssub.s32 16384, 16384
      %44 = vsyncadd [#allocation6], %s43
      %s45 = sshll.u32 [#allocation7], 4
      %s46 = int_to_ptr.vmem [resolvable:$true] %s45
      %51 = dma.hbm_to_vmem [thread:$0]  %s3, 16384, %s46, [#allocation6], 256, 256, 16
    $region17: #{tpu_custom_call.1} parent=1 // pred_fallthru
      _
    // Predicated region
    $region18: #{tpu_custom_call.1} parent=1 // pred_check
      _
    $region19: #{tpu_custom_call.1} parent=1 // pred_check_branch
      %53 = sbr.rel (0) target = $region21
    $region20: #{tpu_custom_call.1} parent=1 // pred_region
      _
    $region21: #{tpu_custom_call.1} parent=1 // pred_fallthru
      _
    // Predicated region
    $region22: #{tpu_custom_call.1} parent=1 // pred_check
      _
    $region23: #{tpu_custom_call.1} parent=1 // pred_check_branch
      %55 = sbr.rel (0) target = $region25
    $region24: #{tpu_custom_call.1} parent=1 // pred_region
      %s57 = ssub.s32 4096, 4096
      %58 = vsyncadd [#allocation9], %s57
      %s59 = sshll.u32 [#allocation8], 4
      %s60 = int_to_ptr.vmem [resolvable:$true] %s59
      %65 = dma.hbm_to_vmem [thread:$0]  %s5, 4096, %s60, [#allocation9], 64, 64, 4
    $region25: #{tpu_custom_call.1} parent=1 // pred_fallthru
      _
    // Predicated region
    $region26: #{tpu_custom_call.1} parent=1 // pred_check
      _
    $region27: #{tpu_custom_call.1} parent=1 // pred_check_branch
      %67 = sbr.rel (0) target = $region29
    $region28: #{tpu_custom_call.1} parent=1 // pred_region
      _
    $region29: #{tpu_custom_call.1} parent=1 // pred_fallthru
      _
    // Predicated region
    $region30: #{tpu_custom_call.1} parent=1 // pred_check
      _
    $region31: #{tpu_custom_call.1} parent=1 // pred_check_branch
      %69 = sbr.rel (0) target = $region33
    $region32: #{tpu_custom_call.1} parent=1 // pred_region
      %70 = dma.done [#allocation3], 128
    $region33: #{tpu_custom_call.1} parent=1 // pred_fallthru
      _
    // Predicated region
    $region34: #{tpu_custom_call.1} parent=1 // pred_check
      _
    $region35: #{tpu_custom_call.1} parent=1 // pred_check_branch
      %72 = sbr.rel (0) target = $region37
    $region36: #{tpu_custom_call.1} parent=1 // pred_region
      %73 = dma.done [#allocation6], 4096
    $region37: #{tpu_custom_call.1} parent=1 // pred_fallthru
      _
    // Predicated region
    $region38: #{tpu_custom_call.1} parent=1 // pred_check
      _
    $region39: #{tpu_custom_call.1} parent=1 // pred_check_branch
      %75 = sbr.rel (0) target = $region41
    $region40: #{tpu_custom_call.1} parent=1 // pred_region
      %76 = dma.done [#allocation6], 16384
    $region41: #{tpu_custom_call.1} parent=1 // pred_fallthru
      _
    // Predicated region
    $region42: #{tpu_custom_call.1} parent=1 // pred_check
      _
    $region43: #{tpu_custom_call.1} parent=1 // pred_check_branch
      %78 = sbr.rel (0) target = $region45
    $region44: #{tpu_custom_call.1} parent=1 // pred_region
      %79 = dma.done [#allocation9], 4096
    $region45: #{tpu_custom_call.1} parent=1 // pred_fallthru
      _
    %v81 = vld [vmem:[#allocation2] sm:$0xff]
    %v82 = vpack.c.bf16 %v81, %v81
    %v83 = vld [vmem:[#allocation5] sm:$0xff]
    %v84 = vld [vmem:[#allocation5 + $0x8] sm:$0xff]
    %v85 = vld [vmem:[#allocation5 + $0x10] sm:$0xff]
    %v86 = vld [vmem:[#allocation5 + $0x18] sm:$0xff]
    %v87 = vld [vmem:[#allocation5 + $0x20] sm:$0xff]
    %v88 = vld [vmem:[#allocation5 + $0x28] sm:$0xff]
    %v89 = vld [vmem:[#allocation5 + $0x30] sm:$0xff]
    %v90 = vld [vmem:[#allocation5 + $0x38] sm:$0xff]
    %v91 = vld [vmem:[#allocation5 + $0x40] sm:$0xff]
    %v92 = vld [vmem:[#allocation5 + $0x48] sm:$0xff]
    %v93 = vld [vmem:[#allocation5 + $0x50] sm:$0xff]
    %v94 = vld [vmem:[#allocation5 + $0x58] sm:$0xff]
    %v95 = vld [vmem:[#allocation5 + $0x60] sm:$0xff]
    %v96 = vld [vmem:[#allocation5 + $0x68] sm:$0xff]
    %v97 = vld [vmem:[#allocation5 + $0x70] sm:$0xff]
    %v98 = vld [vmem:[#allocation5 + $0x78] sm:$0xff]
    %v99 = vld [vmem:[#allocation5 + $0x80] sm:$0xff]
    %v100 = vld [vmem:[#allocation5 + $0x88] sm:$0xff]
    %v101 = vld [vmem:[#allocation5 + $0x90] sm:$0xff]
    %v102 = vld [vmem:[#allocation5 + $0x98] sm:$0xff]
    %v103 = vld [vmem:[#allocation5 + $0xa0] sm:$0xff]
    %v104 = vld [vmem:[#allocation5 + $0xa8] sm:$0xff]
    %v105 = vld [vmem:[#allocation5 + $0xb0] sm:$0xff]
    %v106 = vld [vmem:[#allocation5 + $0xb8] sm:$0xff]
    %v107 = vld [vmem:[#allocation5 + $0xc0] sm:$0xff]
    %v108 = vld [vmem:[#allocation5 + $0xc8] sm:$0xff]
    %v109 = vld [vmem:[#allocation5 + $0xd0] sm:$0xff]
    %v110 = vld [vmem:[#allocation5 + $0xd8] sm:$0xff]
    %v111 = vld [vmem:[#allocation5 + $0xe0] sm:$0xff]
    %v112 = vld [vmem:[#allocation5 + $0xe8] sm:$0xff]
    %v113 = vld [vmem:[#allocation5 + $0xf0] sm:$0xff]
    %v114 = vld [vmem:[#allocation5 + $0xf8] sm:$0xff]
    %v115 = vld [vmem:[%s2] sm:$0xf]
    %v117 = vlaneseq
    %v118 = vshrl.u32 %v117, 7
    %v119 = vsub.s32 0, %v118
    %v120 = vrot.slane %v115, %v119
    %v121 = vlaneseq
    %v122 = vshrl.u32 %v121, 7
    %v123 = vsub.s32 1, %v122
    %v124 = vrot.slane %v115, %v123
    %v125 = vlaneseq
    %v126 = vshrl.u32 %v125, 7
    %v127 = vsub.s32 2, %v126
    %v128 = vrot.slane %v115, %v127
    %v129 = vlaneseq
    %v130 = vshrl.u32 %v129, 7
    %v131 = vsub.s32 3, %v130
    %v132 = vrot.slane %v115, %v131
    %v169 = vunpack.c.l.b16 %v83
    %v170 = vunpack.c.h.b16 %v83
    %v171 = vunpack.c.l.b16 %v84
    %v172 = vunpack.c.h.b16 %v84
    %v173 = vunpack.c.l.b16 %v85
    %v174 = vunpack.c.h.b16 %v85
    %v175 = vunpack.c.l.b16 %v86
    %v176 = vunpack.c.h.b16 %v86
    %v177 = vunpack.c.l.b16 %v87
    %v178 = vunpack.c.h.b16 %v87
    %v179 = vunpack.c.l.b16 %v88
    %v180 = vunpack.c.h.b16 %v88
    %v181 = vunpack.c.l.b16 %v89
    %v182 = vunpack.c.h.b16 %v89
    %v183 = vunpack.c.l.b16 %v90
    %v184 = vunpack.c.h.b16 %v90
    %v185 = vunpack.c.l.b16 %v91
    %v186 = vunpack.c.h.b16 %v91
    %v187 = vunpack.c.l.b16 %v92
    %v188 = vunpack.c.h.b16 %v92
    %v189 = vunpack.c.l.b16 %v93
    %v190 = vunpack.c.h.b16 %v93
    %v191 = vunpack.c.l.b16 %v94
    %v192 = vunpack.c.h.b16 %v94
    %v193 = vunpack.c.l.b16 %v95
    %v194 = vunpack.c.h.b16 %v95
    %v195 = vunpack.c.l.b16 %v96
    %v196 = vunpack.c.h.b16 %v96
    %v197 = vunpack.c.l.b16 %v97
    %v198 = vunpack.c.h.b16 %v97
    %v199 = vunpack.c.l.b16 %v98
    %v200 = vunpack.c.h.b16 %v98
    %v201 = vunpack.c.l.b16 %v99
    %v202 = vunpack.c.h.b16 %v99
    %v203 = vunpack.c.l.b16 %v100
    %v204 = vunpack.c.h.b16 %v100
    %v205 = vunpack.c.l.b16 %v101
    %v206 = vunpack.c.h.b16 %v101
    %v207 = vunpack.c.l.b16 %v102
    %v208 = vunpack.c.h.b16 %v102
    %v209 = vunpack.c.l.b16 %v103
    %v210 = vunpack.c.h.b16 %v103
    %v211 = vunpack.c.l.b16 %v104
    %v212 = vunpack.c.h.b16 %v104
    %v213 = vunpack.c.l.b16 %v105
    %v214 = vunpack.c.h.b16 %v105
    %v215 = vunpack.c.l.b16 %v106
    %v216 = vunpack.c.h.b16 %v106
    %v217 = vunpack.c.l.b16 %v107
    %v218 = vunpack.c.h.b16 %v107
    %v219 = vunpack.c.l.b16 %v108
    %v220 = vunpack.c.h.b16 %v108
    %v221 = vunpack.c.l.b16 %v109
    %v222 = vunpack.c.h.b16 %v109
    %v223 = vunpack.c.l.b16 %v110
    %v224 = vunpack.c.h.b16 %v110
    %v225 = vunpack.c.l.b16 %v111
    %v226 = vunpack.c.h.b16 %v111
    %v227 = vunpack.c.l.b16 %v112
    %v228 = vunpack.c.h.b16 %v112
    %v229 = vunpack.c.l.b16 %v113
    %v230 = vunpack.c.h.b16 %v113
    %v231 = vunpack.c.l.b16 %v114
    %v232 = vunpack.c.h.b16 %v114
    %v233 = vpack.c.b16 %v173, %v169
    %v234 = vpack.c.b16 %v174, %v170
    %v235 = vpack.c.b16 %v175, %v171
    %v236 = vpack.c.b16 %v176, %v172
    %v237 = vpack.c.b16 %v181, %v177
    %v238 = vpack.c.b16 %v182, %v178
    %v239 = vpack.c.b16 %v183, %v179
    %v240 = vpack.c.b16 %v184, %v180
    %v241 = vpack.c.b16 %v189, %v185
    %v242 = vpack.c.b16 %v190, %v186
    %v243 = vpack.c.b16 %v191, %v187
    %v244 = vpack.c.b16 %v192, %v188
    %v245 = vpack.c.b16 %v197, %v193
    %v246 = vpack.c.b16 %v198, %v194
    %v247 = vpack.c.b16 %v199, %v195
    %v248 = vpack.c.b16 %v200, %v196
    %v249 = vpack.c.b16 %v205, %v201
    %v250 = vpack.c.b16 %v206, %v202
    %v251 = vpack.c.b16 %v207, %v203
    %v252 = vpack.c.b16 %v208, %v204
    %v253 = vpack.c.b16 %v213, %v209
    %v254 = vpack.c.b16 %v214, %v210
    %v255 = vpack.c.b16 %v215, %v211
    %v256 = vpack.c.b16 %v216, %v212
    %v257 = vpack.c.b16 %v221, %v217
    %v258 = vpack.c.b16 %v222, %v218
    %v259 = vpack.c.b16 %v223, %v219
    %v260 = vpack.c.b16 %v224, %v220
    %v261 = vpack.c.b16 %v229, %v225
    %v262 = vpack.c.b16 %v230, %v226
    %v263 = vpack.c.b16 %v231, %v227
    %v264 = vpack.c.b16 %v232, %v228
    %297 = vmatprep.subr.bf16.mxu0 %v234
    %298 = vmatpush1.bf16.msra.mxu0 %v233
    %299 = vmatprep.subr.bf16.mxu0 %v238
    %300 = vmatpush1.bf16.msra.mxu0 %v237
    %301 = vmatprep.subr.bf16.mxu0 %v242
    %302 = vmatpush1.bf16.msra.mxu0 %v241
    %303 = vmatprep.subr.bf16.mxu0 %v246
    %304 = vmatpush1.bf16.msra.mxu0 %v245
    %305 = vmatprep.subr.bf16.mxu0 %v250
    %306 = vmatpush1.bf16.msra.mxu0 %v249
    %307 = vmatprep.subr.bf16.mxu0 %v254
    %308 = vmatpush1.bf16.msra.mxu0 %v253
    %309 = vmatprep.subr.bf16.mxu0 %v258
    %310 = vmatpush1.bf16.msra.mxu0 %v257
    %311 = vmatprep.subr.bf16.mxu0 %v262
    %312 = vmatpush1.bf16.msra.mxu0 %v261
    %313 = vmatprep.subr.bf16.mxu0 0
    %314 = vmatpush1.bf16.msra.mxu0 0
    %315 = vmatprep.subr.bf16.mxu0 0
    %316 = vmatpush1.bf16.msra.mxu0 0
    %317 = vmatprep.subr.bf16.mxu0 0
    %318 = vmatpush1.bf16.msra.mxu0 0
    %319 = vmatprep.subr.bf16.mxu0 0
    %320 = vmatpush1.bf16.msra.mxu0 0
    %321 = vmatprep.subr.bf16.mxu0 0
    %322 = vmatpush1.bf16.msra.mxu0 0
    %323 = vmatprep.subr.bf16.mxu0 0
    %324 = vmatpush1.bf16.msra.mxu0 0
    %325 = vmatprep.subr.bf16.mxu0 0
    %326 = vmatpush1.bf16.msra.mxu0 0
    %327 = vmatprep.subr.bf16.mxu0 0
    %328 = vmatpush1.bf16.msra.mxu0 0
    %329 = vmatprep.mubr.bf16.mxu0 0
    %330 = vmatmul.mubr.bf16.gmra.mrb[0].mxu0 %v82
    %v331 = vpop.f32.mrb[0].mxu0
    %v332 = vadd.f32 %v120, %v331
    %v333 = vpop.f32.mrb[0].mxu0
    %v334 = vadd.f32 %v124, %v333
    %v335 = vpop.f32.mrb[0].mxu0
    %v336 = vpop.f32.mrb[0].mxu0
    %337 = vdwg.mxu0
    %338 = vmatprep.subr.bf16.mxu0 %v236
    %339 = vmatpush1.bf16.msra.mxu0 %v235
    %340 = vmatprep.subr.bf16.mxu0 %v240
    %341 = vmatpush1.bf16.msra.mxu0 %v239
    %342 = vmatprep.subr.bf16.mxu0 %v244
    %343 = vmatpush1.bf16.msra.mxu0 %v243
    %344 = vmatprep.subr.bf16.mxu0 %v248
    %345 = vmatpush1.bf16.msra.mxu0 %v247
    %346 = vmatprep.subr.bf16.mxu0 %v252
    %347 = vmatpush1.bf16.msra.mxu0 %v251
    %348 = vmatprep.subr.bf16.mxu0 %v256
    %349 = vmatpush1.bf16.msra.mxu0 %v255
    %350 = vmatprep.subr.bf16.mxu0 %v260
    %351 = vmatpush1.bf16.msra.mxu0 %v259
    %352 = vmatprep.subr.bf16.mxu0 %v264
    %353 = vmatpush1.bf16.msra.mxu0 %v263
    %354 = vmatprep.subr.bf16.mxu0 0
    %355 = vmatpush1.bf16.msra.mxu0 0
    %356 = vmatprep.subr.bf16.mxu0 0
    %357 = vmatpush1.bf16.msra.mxu0 0
    %358 = vmatprep.subr.bf16.mxu0 0
    %359 = vmatpush1.bf16.msra.mxu0 0
    %360 = vmatprep.subr.bf16.mxu0 0
    %361 = vmatpush1.bf16.msra.mxu0 0
    %362 = vmatprep.subr.bf16.mxu0 0
    %363 = vmatpush1.bf16.msra.mxu0 0
    %364 = vmatprep.subr.bf16.mxu0 0
    %365 = vmatpush1.bf16.msra.mxu0 0
    %366 = vmatprep.subr.bf16.mxu0 0
    %367 = vmatpush1.bf16.msra.mxu0 0
    %368 = vmatprep.subr.bf16.mxu0 0
    %369 = vmatpush1.bf16.msra.mxu0 0
    %370 = vmatprep.mubr.bf16.mxu0 0
    %371 = vmatmul.mubr.bf16.gmra.mrb[0].mxu0 %v82
    %v372 = vpop.f32.mrb[0].mxu0
    %v373 = vadd.f32 %v128, %v372
    %v374 = vpop.f32.mrb[0].mxu0
    %v375 = vadd.f32 %v132, %v374
    %v376 = vpop.f32.mrb[0].mxu0
    %v377 = vpop.f32.mrb[0].mxu0
    %378 = vdwg.mxu0
    %v379 = vand.u32 2147483647, %v332
    %vm380 = vcmp.le.f32.partialorder %v379, 0.7853982
    %vm381 = vcmp.lt.s32.totalorder %v332, 0
    %v382 = vand.u32 %v332, 2139095040
    %v383 = vshrl.u32 %v382, 23
    %v384 = vsub.s32 %v383, 127
    %v385 = vand.u32 2147483647, %v332
    %v386 = vand.u32 %v385, 8388607
    %v387 = vor.u32 %v386, 8388608
    %v388 = vsub.s32 0, %v387
    %v389 = vadd.s32 %v384, 1
    %vm390 = vcmp.gt.s32.totalorder %v389, 0
    %v391 = vsel %vm390, %v389, 0
    %v392 = vshrl.u32 %v391, 5
    %v393 = vand.u32 %v391, 31
    %v394 = vsub.s32 32, %v393
    %v395 = vshrl.u32 683565275, %v394
    %v396 = vshll.u32 683565275, %v393
    %v397 = vshrl.u32 2475754826, %v394
    %v398 = vor.u32 %v396, %v397
    %v399 = vshll.u32 2475754826, %v393
    %v400 = vshrl.u32 2131351028, %v394
    %v401 = vor.u32 %v399, %v400
    %v402 = vshll.u32 2131351028, %v393
    %v403 = vshrl.u32 2102212464, %v394
    %v404 = vor.u32 %v402, %v403
    %v405 = vshll.u32 2102212464, %v393
    %v406 = vshrl.u32 920167782, %v394
    %v407 = vor.u32 %v405, %v406
    %v408 = vshll.u32 920167782, %v393
    %v409 = vshrl.u32 1326507024, %v394
    %v410 = vor.u32 %v408, %v409
    %vm411 = vcmp.lt.s32.totalorder %v392, 1
    %vm412 = vcmp.lt.s32.totalorder %v392, 2
    %vm413 = vcmp.lt.s32.totalorder %v392, 3
    %vm414 = vcmp.lt.s32.totalorder %v392, 4
    %v415 = vsel %vm411, %v395, %v398
    %v416 = vsel %vm414, %v404, 2102212464
    %v417 = vsel %vm413, %v401, %v416
    %v418 = vsel %vm412, %v415, %v417
    %v419 = vsel %vm411, %v398, %v401
    %v420 = vsel %vm414, %v407, 920167782
    %v421 = vsel %vm413, %v404, %v420
    %v422 = vsel %vm412, %v419, %v421
    %v423 = vsel %vm411, %v401, %v404
    %v424 = vsel %vm414, %v410, 1326507024
    %v425 = vsel %vm413, %v407, %v424
    %v426 = vsel %vm412, %v423, %v425
    %v427 = vshll.u32 %v387, 8
    %v428 = vmul.u32.u64.compose %v427, %v426
    %v429 = vextract.low.u32 %v428
    %v430 = vextract.high.u32 %v428
    %v431 = vmul.u32.u64.compose %v427, %v422
    %v432 = vextract.low.u32 %v431
    %v433 = vextract.high.u32 %v431
    %v434 = vmul.u32 %v427, %v418
    %v435 = vadd.s32 %v430, %v432
    %vm436 = vc.u32 %v430, %v432
    %v437 = vadd.s32 %v433, 1
    %v438 = vsel %vm436, %v437, %v433
    %v439 = vadd.s32 %v434, %v438
    %v440 = vadd.s32 %v439, 536870912
    %v441 = vshrl.u32 %v440, 30
    %v442 = vshll.u32 %v441, 30
    %v443 = vsub.s32 %v439, %v442
    %vm444 = vcmp.lt.s32.totalorder %v443, 0
    %v445 = vsub.s32 0, %v443
    %v446 = vsel %vm444, %v445, %v443
    %v447 = vclz %v446
    %v448 = vsub.s32 %v447, 2
    %vm449 = vcmp.gt.s32.totalorder 0, %v448
    %v450 = vsel %vm449, 0, %v448
    %v451 = vsub.s32 32, %v450
    %v452 = vshll.u32 %v443, %v450
    %v453 = vshrl.u32 %v435, %v451
    %v454 = vor.u32 %v452, %v453
    %v455 = vsub.s32 4294967266, %v450
    %v456 = vadd.s32 %v455, 127
    %v457 = vshll.u32 %v456, 23
    %v458 = vor.u32 4788187, %v457
    %v459 = vand.u32 2147483647, %v458
    %v461 = vcvt.s32.f32 %v454
    %v462 = vmul.f32 %v461, %v459
    %v463 = vxor.u32 %v462, 2147483648
    %v464 = vsel %vm381, %v463, %v462
    %v465 = vsub.s32 4, %v441
    %v466 = vsel %vm381, %v465, %v441
    %v467 = vsel %vm380, %v332, %v464
    %v468 = vsel %vm380, 0, %v466
    %v469 = vcosq.f32.pop %v467
    %v470 = vsinq.f32.pop %v467
    %vm471 = vweird.f32 %v332
    %v472 = vadd.s32 %v468, 3
    %v473 = vand.u32 %v472, 3
    %vm474 = vcmp.lt.s32.totalorder %v473, 2
    %vm475 = vcmp.eq.s32.totalorder %v473, 0
    %v476 = vxor.u32 %v470, 2147483648
    %v477 = vsel %vm475, %v469, %v476
    %vm478 = vcmp.eq.s32.totalorder %v473, 2
    %v479 = vxor.u32 %v469, 2147483648
    %v480 = vsel %vm478, %v479, %v470
    %v481 = vsel %vm474, %v477, %v480
    %v482 = vsel %vm471, nan, %v481
    %v483 = vand.u32 2147483647, %v334
    %vm484 = vcmp.le.f32.partialorder %v483, 0.7853982
    %vm485 = vcmp.lt.s32.totalorder %v334, 0
    %v486 = vand.u32 %v334, 2139095040
    %v487 = vshrl.u32 %v486, 23
    %v488 = vsub.s32 %v487, 127
    %v489 = vand.u32 2147483647, %v334
    %v490 = vand.u32 %v489, 8388607
    %v491 = vor.u32 %v490, 8388608
    %v492 = vsub.s32 0, %v491
    %v493 = vadd.s32 %v488, 1
    %vm494 = vcmp.gt.s32.totalorder %v493, 0
    %v495 = vsel %vm494, %v493, 0
    %v496 = vshrl.u32 %v495, 5
    %v497 = vand.u32 %v495, 31
    %v498 = vsub.s32 32, %v497
    %v499 = vshrl.u32 683565275, %v498
    %v500 = vshll.u32 683565275, %v497
    %v501 = vshrl.u32 2475754826, %v498
    %v502 = vor.u32 %v500, %v501
    %v503 = vshll.u32 2475754826, %v497
    %v504 = vshrl.u32 2131351028, %v498
    %v505 = vor.u32 %v503, %v504
    %v506 = vshll.u32 2131351028, %v497
    %v507 = vshrl.u32 2102212464, %v498
    %v508 = vor.u32 %v506, %v507
    %v509 = vshll.u32 2102212464, %v497
    %v510 = vshrl.u32 920167782, %v498
    %v511 = vor.u32 %v509, %v510
    %v512 = vshll.u32 920167782, %v497
    %v513 = vshrl.u32 1326507024, %v498
    %v514 = vor.u32 %v512, %v513
    %vm515 = vcmp.lt.s32.totalorder %v496, 1
    %vm516 = vcmp.lt.s32.totalorder %v496, 2
    %vm517 = vcmp.lt.s32.totalorder %v496, 3
    %vm518 = vcmp.lt.s32.totalorder %v496, 4
    %v519 = vsel %vm515, %v499, %v502
    %v520 = vsel %vm518, %v508, 2102212464
    %v521 = vsel %vm517, %v505, %v520
    %v522 = vsel %vm516, %v519, %v521
    %v523 = vsel %vm515, %v502, %v505
    %v524 = vsel %vm518, %v511, 920167782
    %v525 = vsel %vm517, %v508, %v524
    %v526 = vsel %vm516, %v523, %v525
    %v527 = vsel %vm515, %v505, %v508
    %v528 = vsel %vm518, %v514, 1326507024
    %v529 = vsel %vm517, %v511, %v528
    %v530 = vsel %vm516, %v527, %v529
    %v531 = vshll.u32 %v491, 8
    %v532 = vmul.u32.u64.compose %v531, %v530
    %v533 = vextract.low.u32 %v532
    %v534 = vextract.high.u32 %v532
    %v535 = vmul.u32.u64.compose %v531, %v526
    %v536 = vextract.low.u32 %v535
    %v537 = vextract.high.u32 %v535
    %v538 = vmul.u32 %v531, %v522
    %v539 = vadd.s32 %v534, %v536
    %vm540 = vc.u32 %v534, %v536
    %v541 = vadd.s32 %v537, 1
    %v542 = vsel %vm540, %v541, %v537
    %v543 = vadd.s32 %v538, %v542
    %v544 = vadd.s32 %v543, 536870912
    %v545 = vshrl.u32 %v544, 30
    %v546 = vshll.u32 %v545, 30
    %v547 = vsub.s32 %v543, %v546
    %vm548 = vcmp.lt.s32.totalorder %v547, 0
    %v549 = vsub.s32 0, %v547
    %v550 = vsel %vm548, %v549, %v547
    %v551 = vclz %v550
    %v552 = vsub.s32 %v551, 2
    %vm553 = vcmp.gt.s32.totalorder 0, %v552
    %v554 = vsel %vm553, 0, %v552
    %v555 = vsub.s32 32, %v554
    %v556 = vshll.u32 %v547, %v554
    %v557 = vshrl.u32 %v539, %v555
    %v558 = vor.u32 %v556, %v557
    %v559 = vsub.s32 4294967266, %v554
    %v560 = vadd.s32 %v559, 127
    %v561 = vshll.u32 %v560, 23
    %v562 = vor.u32 4788187, %v561
    %v563 = vand.u32 2147483647, %v562
    %v565 = vcvt.s32.f32 %v558
    %v566 = vmul.f32 %v565, %v563
    %v567 = vxor.u32 %v566, 2147483648
    %v568 = vsel %vm485, %v567, %v566
    %v569 = vsub.s32 4, %v545
    %v570 = vsel %vm485, %v569, %v545
    %v571 = vsel %vm484, %v334, %v568
    %v572 = vsel %vm484, 0, %v570
    %v573 = vcosq.f32.pop %v571
    %v574 = vsinq.f32.pop %v571
    %vm575 = vweird.f32 %v334
    %v576 = vadd.s32 %v572, 3
    %v577 = vand.u32 %v576, 3
    %vm578 = vcmp.lt.s32.totalorder %v577, 2
    %vm579 = vcmp.eq.s32.totalorder %v577, 0
    %v580 = vxor.u32 %v574, 2147483648
    %v581 = vsel %vm579, %v573, %v580
    %vm582 = vcmp.eq.s32.totalorder %v577, 2
    %v583 = vxor.u32 %v573, 2147483648
    %v584 = vsel %vm582, %v583, %v574
    %v585 = vsel %vm578, %v581, %v584
    %v586 = vsel %vm575, nan, %v585
    %v587 = vand.u32 2147483647, %v373
    %vm588 = vcmp.le.f32.partialorder %v587, 0.7853982
    %vm589 = vcmp.lt.s32.totalorder %v373, 0
    %v590 = vand.u32 %v373, 2139095040
    %v591 = vshrl.u32 %v590, 23
    %v592 = vsub.s32 %v591, 127
    %v593 = vand.u32 2147483647, %v373
    %v594 = vand.u32 %v593, 8388607
    %v595 = vor.u32 %v594, 8388608
    %v596 = vsub.s32 0, %v595
    %v597 = vadd.s32 %v592, 1
    %vm598 = vcmp.gt.s32.totalorder %v597, 0
    %v599 = vsel %vm598, %v597, 0
    %v600 = vshrl.u32 %v599, 5
    %v601 = vand.u32 %v599, 31
    %v602 = vsub.s32 32, %v601
    %v603 = vshrl.u32 683565275, %v602
    %v604 = vshll.u32 683565275, %v601
    %v605 = vshrl.u32 2475754826, %v602
    %v606 = vor.u32 %v604, %v605
    %v607 = vshll.u32 2475754826, %v601
    %v608 = vshrl.u32 2131351028, %v602
    %v609 = vor.u32 %v607, %v608
    %v610 = vshll.u32 2131351028, %v601
    %v611 = vshrl.u32 2102212464, %v602
    %v612 = vor.u32 %v610, %v611
    %v613 = vshll.u32 2102212464, %v601
    %v614 = vshrl.u32 920167782, %v602
    %v615 = vor.u32 %v613, %v614
    %v616 = vshll.u32 920167782, %v601
    %v617 = vshrl.u32 1326507024, %v602
    %v618 = vor.u32 %v616, %v617
    %vm619 = vcmp.lt.s32.totalorder %v600, 1
    %vm620 = vcmp.lt.s32.totalorder %v600, 2
    %vm621 = vcmp.lt.s32.totalorder %v600, 3
    %vm622 = vcmp.lt.s32.totalorder %v600, 4
    %v623 = vsel %vm619, %v603, %v606
    %v624 = vsel %vm622, %v612, 2102212464
    %v625 = vsel %vm621, %v609, %v624
    %v626 = vsel %vm620, %v623, %v625
    %v627 = vsel %vm619, %v606, %v609
    %v628 = vsel %vm622, %v615, 920167782
    %v629 = vsel %vm621, %v612, %v628
    %v630 = vsel %vm620, %v627, %v629
    %v631 = vsel %vm619, %v609, %v612
    %v632 = vsel %vm622, %v618, 1326507024
    %v633 = vsel %vm621, %v615, %v632
    %v634 = vsel %vm620, %v631, %v633
    %v635 = vshll.u32 %v595, 8
    %v636 = vmul.u32.u64.compose %v635, %v634
    %v637 = vextract.low.u32 %v636
    %v638 = vextract.high.u32 %v636
    %v639 = vmul.u32.u64.compose %v635, %v630
    %v640 = vextract.low.u32 %v639
    %v641 = vextract.high.u32 %v639
    %v642 = vmul.u32 %v635, %v626
    %v643 = vadd.s32 %v638, %v640
    %vm644 = vc.u32 %v638, %v640
    %v645 = vadd.s32 %v641, 1
    %v646 = vsel %vm644, %v645, %v641
    %v647 = vadd.s32 %v642, %v646
    %v648 = vadd.s32 %v647, 536870912
    %v649 = vshrl.u32 %v648, 30
    %v650 = vshll.u32 %v649, 30
    %v651 = vsub.s32 %v647, %v650
    %vm652 = vcmp.lt.s32.totalorder %v651, 0
    %v653 = vsub.s32 0, %v651
    %v654 = vsel %vm652, %v653, %v651
    %v655 = vclz %v654
    %v656 = vsub.s32 %v655, 2
    %vm657 = vcmp.gt.s32.totalorder 0, %v656
    %v658 = vsel %vm657, 0, %v656
    %v659 = vsub.s32 32, %v658
    %v660 = vshll.u32 %v651, %v658
    %v661 = vshrl.u32 %v643, %v659
    %v662 = vor.u32 %v660, %v661
    %v663 = vsub.s32 4294967266, %v658
    %v664 = vadd.s32 %v663, 127
    %v665 = vshll.u32 %v664, 23
    %v666 = vor.u32 4788187, %v665
    %v667 = vand.u32 2147483647, %v666
    %v669 = vcvt.s32.f32 %v662
    %v670 = vmul.f32 %v669, %v667
    %v671 = vxor.u32 %v670, 2147483648
    %v672 = vsel %vm589, %v671, %v670
    %v673 = vsub.s32 4, %v649
    %v674 = vsel %vm589, %v673, %v649
    %v675 = vsel %vm588, %v373, %v672
    %v676 = vsel %vm588, 0, %v674
    %v677 = vcosq.f32.pop %v675
    %v678 = vsinq.f32.pop %v675
    %vm679 = vweird.f32 %v373
    %v680 = vadd.s32 %v676, 3
    %v681 = vand.u32 %v680, 3
    %vm682 = vcmp.lt.s32.totalorder %v681, 2
    %vm683 = vcmp.eq.s32.totalorder %v681, 0
    %v684 = vxor.u32 %v678, 2147483648
    %v685 = vsel %vm683, %v677, %v684
    %vm686 = vcmp.eq.s32.totalorder %v681, 2
    %v687 = vxor.u32 %v677, 2147483648
    %v688 = vsel %vm686, %v687, %v678
    %v689 = vsel %vm682, %v685, %v688
    %v690 = vsel %vm679, nan, %v689
    %v691 = vand.u32 2147483647, %v375
    %vm692 = vcmp.le.f32.partialorder %v691, 0.7853982
    %vm693 = vcmp.lt.s32.totalorder %v375, 0
    %v694 = vand.u32 %v375, 2139095040
    %v695 = vshrl.u32 %v694, 23
    %v696 = vsub.s32 %v695, 127
    %v697 = vand.u32 2147483647, %v375
    %v698 = vand.u32 %v697, 8388607
    %v699 = vor.u32 %v698, 8388608
    %v700 = vsub.s32 0, %v699
    %v701 = vadd.s32 %v696, 1
    %vm702 = vcmp.gt.s32.totalorder %v701, 0
    %v703 = vsel %vm702, %v701, 0
    %v704 = vshrl.u32 %v703, 5
    %v705 = vand.u32 %v703, 31
    %v706 = vsub.s32 32, %v705
    %v707 = vshrl.u32 683565275, %v706
    %v708 = vshll.u32 683565275, %v705
    %v709 = vshrl.u32 2475754826, %v706
    %v710 = vor.u32 %v708, %v709
    %v711 = vshll.u32 2475754826, %v705
    %v712 = vshrl.u32 2131351028, %v706
    %v713 = vor.u32 %v711, %v712
    %v714 = vshll.u32 2131351028, %v705
    %v715 = vshrl.u32 2102212464, %v706
    %v716 = vor.u32 %v714, %v715
    %v717 = vshll.u32 2102212464, %v705
    %v718 = vshrl.u32 920167782, %v706
    %v719 = vor.u32 %v717, %v718
    %v720 = vshll.u32 920167782, %v705
    %v721 = vshrl.u32 1326507024, %v706
    %v722 = vor.u32 %v720, %v721
    %vm723 = vcmp.lt.s32.totalorder %v704, 1
    %vm724 = vcmp.lt.s32.totalorder %v704, 2
    %vm725 = vcmp.lt.s32.totalorder %v704, 3
    %vm726 = vcmp.lt.s32.totalorder %v704, 4
    %v727 = vsel %vm723, %v707, %v710
    %v728 = vsel %vm726, %v716, 2102212464
    %v729 = vsel %vm725, %v713, %v728
    %v730 = vsel %vm724, %v727, %v729
    %v731 = vsel %vm723, %v710, %v713
    %v732 = vsel %vm726, %v719, 920167782
    %v733 = vsel %vm725, %v716, %v732
    %v734 = vsel %vm724, %v731, %v733
    %v735 = vsel %vm723, %v713, %v716
    %v736 = vsel %vm726, %v722, 1326507024
    %v737 = vsel %vm725, %v719, %v736
    %v738 = vsel %vm724, %v735, %v737
    %v739 = vshll.u32 %v699, 8
    %v740 = vmul.u32.u64.compose %v739, %v738
    %v741 = vextract.low.u32 %v740
    %v742 = vextract.high.u32 %v740
    %v743 = vmul.u32.u64.compose %v739, %v734
    %v744 = vextract.low.u32 %v743
    %v745 = vextract.high.u32 %v743
    %v746 = vmul.u32 %v739, %v730
    %v747 = vadd.s32 %v742, %v744
    %vm748 = vc.u32 %v742, %v744
    %v749 = vadd.s32 %v745, 1
    %v750 = vsel %vm748, %v749, %v745
    %v751 = vadd.s32 %v746, %v750
    %v752 = vadd.s32 %v751, 536870912
    %v753 = vshrl.u32 %v752, 30
    %v754 = vshll.u32 %v753, 30
    %v755 = vsub.s32 %v751, %v754
    %vm756 = vcmp.lt.s32.totalorder %v755, 0
    %v757 = vsub.s32 0, %v755
    %v758 = vsel %vm756, %v757, %v755
    %v759 = vclz %v758
    %v760 = vsub.s32 %v759, 2
    %vm761 = vcmp.gt.s32.totalorder 0, %v760
    %v762 = vsel %vm761, 0, %v760
    %v763 = vsub.s32 32, %v762
    %v764 = vshll.u32 %v755, %v762
    %v765 = vshrl.u32 %v747, %v763
    %v766 = vor.u32 %v764, %v765
    %v767 = vsub.s32 4294967266, %v762
    %v768 = vadd.s32 %v767, 127
    %v769 = vshll.u32 %v768, 23
    %v770 = vor.u32 4788187, %v769
    %v771 = vand.u32 2147483647, %v770
    %v773 = vcvt.s32.f32 %v766
    %v774 = vmul.f32 %v773, %v771
    %v775 = vxor.u32 %v774, 2147483648
    %v776 = vsel %vm693, %v775, %v774
    %v777 = vsub.s32 4, %v753
    %v778 = vsel %vm693, %v777, %v753
    %v779 = vsel %vm692, %v375, %v776
    %v780 = vsel %vm692, 0, %v778
    %v781 = vcosq.f32.pop %v779
    %v782 = vsinq.f32.pop %v779
    %vm783 = vweird.f32 %v375
    %v784 = vadd.s32 %v780, 3
    %v785 = vand.u32 %v784, 3
    %vm786 = vcmp.lt.s32.totalorder %v785, 2
    %vm787 = vcmp.eq.s32.totalorder %v785, 0
    %v788 = vxor.u32 %v782, 2147483648
    %v789 = vsel %vm787, %v781, %v788
    %vm790 = vcmp.eq.s32.totalorder %v785, 2
    %v791 = vxor.u32 %v781, 2147483648
    %v792 = vsel %vm790, %v791, %v782
    %v793 = vsel %vm786, %v789, %v792
    %v794 = vsel %vm783, nan, %v793
    %v795 = vpack.c.bf16 %v482, %v482
    %v796 = vpack.c.bf16 %v586, %v586
    %v797 = vpack.c.bf16 %v690, %v690
    %v798 = vpack.c.bf16 %v794, %v794
    %v799 = vld [vmem:[#allocation7] sm:$0xff]
    %v800 = vld [vmem:[#allocation7 + $0x8] sm:$0xff]
    %v801 = vld [vmem:[#allocation7 + $0x10] sm:$0xff]
    %v802 = vld [vmem:[#allocation7 + $0x18] sm:$0xff]
    %v803 = vld [vmem:[#allocation7 + $0x20] sm:$0xff]
    %v804 = vld [vmem:[#allocation7 + $0x28] sm:$0xff]
    %v805 = vld [vmem:[#allocation7 + $0x30] sm:$0xff]
    %v806 = vld [vmem:[#allocation7 + $0x38] sm:$0xff]
    %v807 = vld [vmem:[#allocation7 + $0x40] sm:$0xff]
    %v808 = vld [vmem:[#allocation7 + $0x48] sm:$0xff]
    %v809 = vld [vmem:[#allocation7 + $0x50] sm:$0xff]
    %v810 = vld [vmem:[#allocation7 + $0x58] sm:$0xff]
    %v811 = vld [vmem:[#allocation7 + $0x60] sm:$0xff]
    %v812 = vld [vmem:[#allocation7 + $0x68] sm:$0xff]
    %v813 = vld [vmem:[#allocation7 + $0x70] sm:$0xff]
    %v814 = vld [vmem:[#allocation7 + $0x78] sm:$0xff]
    %v815 = vld [vmem:[#allocation7 + $0x80] sm:$0xff]
    %v816 = vld [vmem:[#allocation7 + $0x88] sm:$0xff]
    %v817 = vld [vmem:[#allocation7 + $0x90] sm:$0xff]
    %v818 = vld [vmem:[#allocation7 + $0x98] sm:$0xff]
    %v819 = vld [vmem:[#allocation7 + $0xa0] sm:$0xff]
    %v820 = vld [vmem:[#allocation7 + $0xa8] sm:$0xff]
    %v821 = vld [vmem:[#allocation7 + $0xb0] sm:$0xff]
    %v822 = vld [vmem:[#allocation7 + $0xb8] sm:$0xff]
    %v823 = vld [vmem:[#allocation7 + $0xc0] sm:$0xff]
    %v824 = vld [vmem:[#allocation7 + $0xc8] sm:$0xff]
    %v825 = vld [vmem:[#allocation7 + $0xd0] sm:$0xff]
    %v826 = vld [vmem:[#allocation7 + $0xd8] sm:$0xff]
    %v827 = vld [vmem:[#allocation7 + $0xe0] sm:$0xff]
    %v828 = vld [vmem:[#allocation7 + $0xe8] sm:$0xff]
    %v829 = vld [vmem:[#allocation7 + $0xf0] sm:$0xff]
    %v830 = vld [vmem:[#allocation7 + $0xf8] sm:$0xff]
    %v831 = vld [vmem:[#allocation7 + $0x100] sm:$0xff]
    %v832 = vld [vmem:[#allocation7 + $0x108] sm:$0xff]
    %v833 = vld [vmem:[#allocation7 + $0x110] sm:$0xff]
    %v834 = vld [vmem:[#allocation7 + $0x118] sm:$0xff]
    %v835 = vld [vmem:[#allocation7 + $0x120] sm:$0xff]
    %v836 = vld [vmem:[#allocation7 + $0x128] sm:$0xff]
    %v837 = vld [vmem:[#allocation7 + $0x130] sm:$0xff]
    %v838 = vld [vmem:[#allocation7 + $0x138] sm:$0xff]
    %v839 = vld [vmem:[#allocation7 + $0x140] sm:$0xff]
    %v840 = vld [vmem:[#allocation7 + $0x148] sm:$0xff]
    %v841 = vld [vmem:[#allocation7 + $0x150] sm:$0xff]
    %v842 = vld [vmem:[#allocation7 + $0x158] sm:$0xff]
    %v843 = vld [vmem:[#allocation7 + $0x160] sm:$0xff]
    %v844 = vld [vmem:[#allocation7 + $0x168] sm:$0xff]
    %v845 = vld [vmem:[#allocation7 + $0x170] sm:$0xff]
    %v846 = vld [vmem:[#allocation7 + $0x178] sm:$0xff]
    %v847 = vld [vmem:[#allocation7 + $0x180] sm:$0xff]
    %v848 = vld [vmem:[#allocation7 + $0x188] sm:$0xff]
    %v849 = vld [vmem:[#allocation7 + $0x190] sm:$0xff]
    %v850 = vld [vmem:[#allocation7 + $0x198] sm:$0xff]
    %v851 = vld [vmem:[#allocation7 + $0x1a0] sm:$0xff]
    %v852 = vld [vmem:[#allocation7 + $0x1a8] sm:$0xff]
    %v853 = vld [vmem:[#allocation7 + $0x1b0] sm:$0xff]
    %v854 = vld [vmem:[#allocation7 + $0x1b8] sm:$0xff]
    %v855 = vld [vmem:[#allocation7 + $0x1c0] sm:$0xff]
    %v856 = vld [vmem:[#allocation7 + $0x1c8] sm:$0xff]
    %v857 = vld [vmem:[#allocation7 + $0x1d0] sm:$0xff]
    %v858 = vld [vmem:[#allocation7 + $0x1d8] sm:$0xff]
    %v859 = vld [vmem:[#allocation7 + $0x1e0] sm:$0xff]
    %v860 = vld [vmem:[#allocation7 + $0x1e8] sm:$0xff]
    %v861 = vld [vmem:[#allocation7 + $0x1f0] sm:$0xff]
    %v862 = vld [vmem:[#allocation7 + $0x1f8] sm:$0xff]
    %v863 = vld [vmem:[#allocation7 + $0x200] sm:$0xff]
    %v864 = vld [vmem:[#allocation7 + $0x208] sm:$0xff]
    %v865 = vld [vmem:[#allocation7 + $0x210] sm:$0xff]
    %v866 = vld [vmem:[#allocation7 + $0x218] sm:$0xff]
    %v867 = vld [vmem:[#allocation7 + $0x220] sm:$0xff]
    %v868 = vld [vmem:[#allocation7 + $0x228] sm:$0xff]
    %v869 = vld [vmem:[#allocation7 + $0x230] sm:$0xff]
    %v870 = vld [vmem:[#allocation7 + $0x238] sm:$0xff]
    %v871 = vld [vmem:[#allocation7 + $0x240] sm:$0xff]
    %v872 = vld [vmem:[#allocation7 + $0x248] sm:$0xff]
    %v873 = vld [vmem:[#allocation7 + $0x250] sm:$0xff]
    %v874 = vld [vmem:[#allocation7 + $0x258] sm:$0xff]
    %v875 = vld [vmem:[#allocation7 + $0x260] sm:$0xff]
    %v876 = vld [vmem:[#allocation7 + $0x268] sm:$0xff]
    %v877 = vld [vmem:[#allocation7 + $0x270] sm:$0xff]
    %v878 = vld [vmem:[#allocation7 + $0x278] sm:$0xff]
    %v879 = vld [vmem:[#allocation7 + $0x280] sm:$0xff]
    %v880 = vld [vmem:[#allocation7 + $0x288] sm:$0xff]
    %v881 = vld [vmem:[#allocation7 + $0x290] sm:$0xff]
    %v882 = vld [vmem:[#allocation7 + $0x298] sm:$0xff]
    %v883 = vld [vmem:[#allocation7 + $0x2a0] sm:$0xff]
    %v884 = vld [vmem:[#allocation7 + $0x2a8] sm:$0xff]
    %v885 = vld [vmem:[#allocation7 + $0x2b0] sm:$0xff]
    %v886 = vld [vmem:[#allocation7 + $0x2b8] sm:$0xff]
    %v887 = vld [vmem:[#allocation7 + $0x2c0] sm:$0xff]
    %v888 = vld [vmem:[#allocation7 + $0x2c8] sm:$0xff]
    %v889 = vld [vmem:[#allocation7 + $0x2d0] sm:$0xff]
    %v890 = vld [vmem:[#allocation7 + $0x2d8] sm:$0xff]
    %v891 = vld [vmem:[#allocation7 + $0x2e0] sm:$0xff]
    %v892 = vld [vmem:[#allocation7 + $0x2e8] sm:$0xff]
    %v893 = vld [vmem:[#allocation7 + $0x2f0] sm:$0xff]
    %v894 = vld [vmem:[#allocation7 + $0x2f8] sm:$0xff]
    %v895 = vld [vmem:[#allocation7 + $0x300] sm:$0xff]
    %v896 = vld [vmem:[#allocation7 + $0x308] sm:$0xff]
    %v897 = vld [vmem:[#allocation7 + $0x310] sm:$0xff]
    %v898 = vld [vmem:[#allocation7 + $0x318] sm:$0xff]
    %v899 = vld [vmem:[#allocation7 + $0x320] sm:$0xff]
    %v900 = vld [vmem:[#allocation7 + $0x328] sm:$0xff]
    %v901 = vld [vmem:[#allocation7 + $0x330] sm:$0xff]
    %v902 = vld [vmem:[#allocation7 + $0x338] sm:$0xff]
    %v903 = vld [vmem:[#allocation7 + $0x340] sm:$0xff]
    %v904 = vld [vmem:[#allocation7 + $0x348] sm:$0xff]
    %v905 = vld [vmem:[#allocation7 + $0x350] sm:$0xff]
    %v906 = vld [vmem:[#allocation7 + $0x358] sm:$0xff]
    %v907 = vld [vmem:[#allocation7 + $0x360] sm:$0xff]
    %v908 = vld [vmem:[#allocation7 + $0x368] sm:$0xff]
    %v909 = vld [vmem:[#allocation7 + $0x370] sm:$0xff]
    %v910 = vld [vmem:[#allocation7 + $0x378] sm:$0xff]
    %v911 = vld [vmem:[#allocation7 + $0x380] sm:$0xff]
    %v912 = vld [vmem:[#allocation7 + $0x388] sm:$0xff]
    %v913 = vld [vmem:[#allocation7 + $0x390] sm:$0xff]
    %v914 = vld [vmem:[#allocation7 + $0x398] sm:$0xff]
    %v915 = vld [vmem:[#allocation7 + $0x3a0] sm:$0xff]
    %v916 = vld [vmem:[#allocation7 + $0x3a8] sm:$0xff]
    %v917 = vld [vmem:[#allocation7 + $0x3b0] sm:$0xff]
    %v918 = vld [vmem:[#allocation7 + $0x3b8] sm:$0xff]
    %v919 = vld [vmem:[#allocation7 + $0x3c0] sm:$0xff]
    %v920 = vld [vmem:[#allocation7 + $0x3c8] sm:$0xff]
    %v921 = vld [vmem:[#allocation7 + $0x3d0] sm:$0xff]
    %v922 = vld [vmem:[#allocation7 + $0x3d8] sm:$0xff]
    %v923 = vld [vmem:[#allocation7 + $0x3e0] sm:$0xff]
    %v924 = vld [vmem:[#allocation7 + $0x3e8] sm:$0xff]
    %v925 = vld [vmem:[#allocation7 + $0x3f0] sm:$0xff]
    %v926 = vld [vmem:[#allocation7 + $0x3f8] sm:$0xff]
    %v927 = vld [vmem:[%s4] sm:$0xf]
    %v929 = vlaneseq
    %v930 = vshrl.u32 %v929, 7
    %v931 = vsub.s32 0, %v930
    %v932 = vrot.slane %v927, %v931
    %v933 = vlaneseq
    %v934 = vshrl.u32 %v933, 7
    %v935 = vsub.s32 1, %v934
    %v936 = vrot.slane %v927, %v935
    %v937 = vlaneseq
    %v938 = vshrl.u32 %v937, 7
    %v939 = vsub.s32 2, %v938
    %v940 = vrot.slane %v927, %v939
    %v941 = vlaneseq
    %v942 = vshrl.u32 %v941, 7
    %v943 = vsub.s32 3, %v942
    %v944 = vrot.slane %v927, %v943
    %v1077 = vunpack.c.l.b16 %v799
    %v1078 = vunpack.c.h.b16 %v799
    %v1079 = vunpack.c.l.b16 %v800
    %v1080 = vunpack.c.h.b16 %v800
    %v1081 = vunpack.c.l.b16 %v801
    %v1082 = vunpack.c.h.b16 %v801
    %v1083 = vunpack.c.l.b16 %v802
    %v1084 = vunpack.c.h.b16 %v802
    %v1085 = vunpack.c.l.b16 %v803
    %v1086 = vunpack.c.h.b16 %v803
    %v1087 = vunpack.c.l.b16 %v804
    %v1088 = vunpack.c.h.b16 %v804
    %v1089 = vunpack.c.l.b16 %v805
    %v1090 = vunpack.c.h.b16 %v805
    %v1091 = vunpack.c.l.b16 %v806
    %v1092 = vunpack.c.h.b16 %v806
    %v1093 = vunpack.c.l.b16 %v807
    %v1094 = vunpack.c.h.b16 %v807
    %v1095 = vunpack.c.l.b16 %v808
    %v1096 = vunpack.c.h.b16 %v808
    %v1097 = vunpack.c.l.b16 %v809
    %v1098 = vunpack.c.h.b16 %v809
    %v1099 = vunpack.c.l.b16 %v810
    %v1100 = vunpack.c.h.b16 %v810
    %v1101 = vunpack.c.l.b16 %v811
    %v1102 = vunpack.c.h.b16 %v811
    %v1103 = vunpack.c.l.b16 %v812
    %v1104 = vunpack.c.h.b16 %v812
    %v1105 = vunpack.c.l.b16 %v813
    %v1106 = vunpack.c.h.b16 %v813
    %v1107 = vunpack.c.l.b16 %v814
    %v1108 = vunpack.c.h.b16 %v814
    %v1109 = vunpack.c.l.b16 %v815
    %v1110 = vunpack.c.h.b16 %v815
    %v1111 = vunpack.c.l.b16 %v816
    %v1112 = vunpack.c.h.b16 %v816
    %v1113 = vunpack.c.l.b16 %v817
    %v1114 = vunpack.c.h.b16 %v817
    %v1115 = vunpack.c.l.b16 %v818
    %v1116 = vunpack.c.h.b16 %v818
    %v1117 = vunpack.c.l.b16 %v819
    %v1118 = vunpack.c.h.b16 %v819
    %v1119 = vunpack.c.l.b16 %v820
    %v1120 = vunpack.c.h.b16 %v820
    %v1121 = vunpack.c.l.b16 %v821
    %v1122 = vunpack.c.h.b16 %v821
    %v1123 = vunpack.c.l.b16 %v822
    %v1124 = vunpack.c.h.b16 %v822
    %v1125 = vunpack.c.l.b16 %v823
    %v1126 = vunpack.c.h.b16 %v823
    %v1127 = vunpack.c.l.b16 %v824
    %v1128 = vunpack.c.h.b16 %v824
    %v1129 = vunpack.c.l.b16 %v825
    %v1130 = vunpack.c.h.b16 %v825
    %v1131 = vunpack.c.l.b16 %v826
    %v1132 = vunpack.c.h.b16 %v826
    %v1133 = vunpack.c.l.b16 %v827
    %v1134 = vunpack.c.h.b16 %v827
    %v1135 = vunpack.c.l.b16 %v828
    %v1136 = vunpack.c.h.b16 %v828
    %v1137 = vunpack.c.l.b16 %v829
    %v1138 = vunpack.c.h.b16 %v829
    %v1139 = vunpack.c.l.b16 %v830
    %v1140 = vunpack.c.h.b16 %v830
    %v1141 = vunpack.c.l.b16 %v831
    %v1142 = vunpack.c.h.b16 %v831
    %v1143 = vunpack.c.l.b16 %v832
    %v1144 = vunpack.c.h.b16 %v832
    %v1145 = vunpack.c.l.b16 %v833
    %v1146 = vunpack.c.h.b16 %v833
    %v1147 = vunpack.c.l.b16 %v834
    %v1148 = vunpack.c.h.b16 %v834
    %v1149 = vunpack.c.l.b16 %v835
    %v1150 = vunpack.c.h.b16 %v835
    %v1151 = vunpack.c.l.b16 %v836
    %v1152 = vunpack.c.h.b16 %v836
    %v1153 = vunpack.c.l.b16 %v837
    %v1154 = vunpack.c.h.b16 %v837
    %v1155 = vunpack.c.l.b16 %v838
    %v1156 = vunpack.c.h.b16 %v838
    %v1157 = vunpack.c.l.b16 %v839
    %v1158 = vunpack.c.h.b16 %v839
    %v1159 = vunpack.c.l.b16 %v840
    %v1160 = vunpack.c.h.b16 %v840
    %v1161 = vunpack.c.l.b16 %v841
    %v1162 = vunpack.c.h.b16 %v841
    %v1163 = vunpack.c.l.b16 %v842
    %v1164 = vunpack.c.h.b16 %v842
    %v1165 = vunpack.c.l.b16 %v843
    %v1166 = vunpack.c.h.b16 %v843
    %v1167 = vunpack.c.l.b16 %v844
    %v1168 = vunpack.c.h.b16 %v844
    %v1169 = vunpack.c.l.b16 %v845
    %v1170 = vunpack.c.h.b16 %v845
    %v1171 = vunpack.c.l.b16 %v846
    %v1172 = vunpack.c.h.b16 %v846
    %v1173 = vunpack.c.l.b16 %v847
    %v1174 = vunpack.c.h.b16 %v847
    %v1175 = vunpack.c.l.b16 %v848
    %v1176 = vunpack.c.h.b16 %v848
    %v1177 = vunpack.c.l.b16 %v849
    %v1178 = vunpack.c.h.b16 %v849
    %v1179 = vunpack.c.l.b16 %v850
    %v1180 = vunpack.c.h.b16 %v850
    %v1181 = vunpack.c.l.b16 %v851
    %v1182 = vunpack.c.h.b16 %v851
    %v1183 = vunpack.c.l.b16 %v852
    %v1184 = vunpack.c.h.b16 %v852
    %v1185 = vunpack.c.l.b16 %v853
    %v1186 = vunpack.c.h.b16 %v853
    %v1187 = vunpack.c.l.b16 %v854
    %v1188 = vunpack.c.h.b16 %v854
    %v1189 = vunpack.c.l.b16 %v855
    %v1190 = vunpack.c.h.b16 %v855
    %v1191 = vunpack.c.l.b16 %v856
    %v1192 = vunpack.c.h.b16 %v856
    %v1193 = vunpack.c.l.b16 %v857
    %v1194 = vunpack.c.h.b16 %v857
    %v1195 = vunpack.c.l.b16 %v858
    %v1196 = vunpack.c.h.b16 %v858
    %v1197 = vunpack.c.l.b16 %v859
    %v1198 = vunpack.c.h.b16 %v859
    %v1199 = vunpack.c.l.b16 %v860
    %v1200 = vunpack.c.h.b16 %v860
    %v1201 = vunpack.c.l.b16 %v861
    %v1202 = vunpack.c.h.b16 %v861
    %v1203 = vunpack.c.l.b16 %v862
    %v1204 = vunpack.c.h.b16 %v862
    %v1205 = vunpack.c.l.b16 %v863
    %v1206 = vunpack.c.h.b16 %v863
    %v1207 = vunpack.c.l.b16 %v864
    %v1208 = vunpack.c.h.b16 %v864
    %v1209 = vunpack.c.l.b16 %v865
    %v1210 = vunpack.c.h.b16 %v865
    %v1211 = vunpack.c.l.b16 %v866
    %v1212 = vunpack.c.h.b16 %v866
    %v1213 = vunpack.c.l.b16 %v867
    %v1214 = vunpack.c.h.b16 %v867
    %v1215 = vunpack.c.l.b16 %v868
    %v1216 = vunpack.c.h.b16 %v868
    %v1217 = vunpack.c.l.b16 %v869
    %v1218 = vunpack.c.h.b16 %v869
    %v1219 = vunpack.c.l.b16 %v870
    %v1220 = vunpack.c.h.b16 %v870
    %v1221 = vunpack.c.l.b16 %v871
    %v1222 = vunpack.c.h.b16 %v871
    %v1223 = vunpack.c.l.b16 %v872
    %v1224 = vunpack.c.h.b16 %v872
    %v1225 = vunpack.c.l.b16 %v873
    %v1226 = vunpack.c.h.b16 %v873
    %v1227 = vunpack.c.l.b16 %v874
    %v1228 = vunpack.c.h.b16 %v874
    %v1229 = vunpack.c.l.b16 %v875
    %v1230 = vunpack.c.h.b16 %v875
    %v1231 = vunpack.c.l.b16 %v876
    %v1232 = vunpack.c.h.b16 %v876
    %v1233 = vunpack.c.l.b16 %v877
    %v1234 = vunpack.c.h.b16 %v877
    %v1235 = vunpack.c.l.b16 %v878
    %v1236 = vunpack.c.h.b16 %v878
    %v1237 = vunpack.c.l.b16 %v879
    %v1238 = vunpack.c.h.b16 %v879
    %v1239 = vunpack.c.l.b16 %v880
    %v1240 = vunpack.c.h.b16 %v880
    %v1241 = vunpack.c.l.b16 %v881
    %v1242 = vunpack.c.h.b16 %v881
    %v1243 = vunpack.c.l.b16 %v882
    %v1244 = vunpack.c.h.b16 %v882
    %v1245 = vunpack.c.l.b16 %v883
    %v1246 = vunpack.c.h.b16 %v883
    %v1247 = vunpack.c.l.b16 %v884
    %v1248 = vunpack.c.h.b16 %v884
    %v1249 = vunpack.c.l.b16 %v885
    %v1250 = vunpack.c.h.b16 %v885
    %v1251 = vunpack.c.l.b16 %v886
    %v1252 = vunpack.c.h.b16 %v886
    %v1253 = vunpack.c.l.b16 %v887
    %v1254 = vunpack.c.h.b16 %v887
    %v1255 = vunpack.c.l.b16 %v888
    %v1256 = vunpack.c.h.b16 %v888
    %v1257 = vunpack.c.l.b16 %v889
    %v1258 = vunpack.c.h.b16 %v889
    %v1259 = vunpack.c.l.b16 %v890
    %v1260 = vunpack.c.h.b16 %v890
    %v1261 = vunpack.c.l.b16 %v891
    %v1262 = vunpack.c.h.b16 %v891
    %v1263 = vunpack.c.l.b16 %v892
    %v1264 = vunpack.c.h.b16 %v892
    %v1265 = vunpack.c.l.b16 %v893
    %v1266 = vunpack.c.h.b16 %v893
    %v1267 = vunpack.c.l.b16 %v894
    %v1268 = vunpack.c.h.b16 %v894
    %v1269 = vunpack.c.l.b16 %v895
    %v1270 = vunpack.c.h.b16 %v895
    %v1271 = vunpack.c.l.b16 %v896
    %v1272 = vunpack.c.h.b16 %v896
    %v1273 = vunpack.c.l.b16 %v897
    %v1274 = vunpack.c.h.b16 %v897
    %v1275 = vunpack.c.l.b16 %v898
    %v1276 = vunpack.c.h.b16 %v898
    %v1277 = vunpack.c.l.b16 %v899
    %v1278 = vunpack.c.h.b16 %v899
    %v1279 = vunpack.c.l.b16 %v900
    %v1280 = vunpack.c.h.b16 %v900
    %v1281 = vunpack.c.l.b16 %v901
    %v1282 = vunpack.c.h.b16 %v901
    %v1283 = vunpack.c.l.b16 %v902
    %v1284 = vunpack.c.h.b16 %v902
    %v1285 = vunpack.c.l.b16 %v903
    %v1286 = vunpack.c.h.b16 %v903
    %v1287 = vunpack.c.l.b16 %v904
    %v1288 = vunpack.c.h.b16 %v904
    %v1289 = vunpack.c.l.b16 %v905
    %v1290 = vunpack.c.h.b16 %v905
    %v1291 = vunpack.c.l.b16 %v906
    %v1292 = vunpack.c.h.b16 %v906
    %v1293 = vunpack.c.l.b16 %v907
    %v1294 = vunpack.c.h.b16 %v907
    %v1295 = vunpack.c.l.b16 %v908
    %v1296 = vunpack.c.h.b16 %v908
    %v1297 = vunpack.c.l.b16 %v909
    %v1298 = vunpack.c.h.b16 %v909
    %v1299 = vunpack.c.l.b16 %v910
    %v1300 = vunpack.c.h.b16 %v910
    %v1301 = vunpack.c.l.b16 %v911
    %v1302 = vunpack.c.h.b16 %v911
    %v1303 = vunpack.c.l.b16 %v912
    %v1304 = vunpack.c.h.b16 %v912
    %v1305 = vunpack.c.l.b16 %v913
    %v1306 = vunpack.c.h.b16 %v913
    %v1307 = vunpack.c.l.b16 %v914
    %v1308 = vunpack.c.h.b16 %v914
    %v1309 = vunpack.c.l.b16 %v915
    %v1310 = vunpack.c.h.b16 %v915
    %v1311 = vunpack.c.l.b16 %v916
    %v1312 = vunpack.c.h.b16 %v916
    %v1313 = vunpack.c.l.b16 %v917
    %v1314 = vunpack.c.h.b16 %v917
    %v1315 = vunpack.c.l.b16 %v918
    %v1316 = vunpack.c.h.b16 %v918
    %v1317 = vunpack.c.l.b16 %v919
    %v1318 = vunpack.c.h.b16 %v919
    %v1319 = vunpack.c.l.b16 %v920
    %v1320 = vunpack.c.h.b16 %v920
    %v1321 = vunpack.c.l.b16 %v921
    %v1322 = vunpack.c.h.b16 %v921
    %v1323 = vunpack.c.l.b16 %v922
    %v1324 = vunpack.c.h.b16 %v922
    %v1325 = vunpack.c.l.b16 %v923
    %v1326 = vunpack.c.h.b16 %v923
    %v1327 = vunpack.c.l.b16 %v924
    %v1328 = vunpack.c.h.b16 %v924
    %v1329 = vunpack.c.l.b16 %v925
    %v1330 = vunpack.c.h.b16 %v925
    %v1331 = vunpack.c.l.b16 %v926
    %v1332 = vunpack.c.h.b16 %v926
    %v1333 = vpack.c.b16 %v1081, %v1077
    %v1334 = vpack.c.b16 %v1082, %v1078
    %v1335 = vpack.c.b16 %v1083, %v1079
    %v1336 = vpack.c.b16 %v1084, %v1080
    %v1337 = vpack.c.b16 %v1089, %v1085
    %v1338 = vpack.c.b16 %v1090, %v1086
    %v1339 = vpack.c.b16 %v1091, %v1087
    %v1340 = vpack.c.b16 %v1092, %v1088
    %v1341 = vpack.c.b16 %v1097, %v1093
    %v1342 = vpack.c.b16 %v1098, %v1094
    %v1343 = vpack.c.b16 %v1099, %v1095
    %v1344 = vpack.c.b16 %v1100, %v1096
    %v1345 = vpack.c.b16 %v1105, %v1101
    %v1346 = vpack.c.b16 %v1106, %v1102
    %v1347 = vpack.c.b16 %v1107, %v1103
    %v1348 = vpack.c.b16 %v1108, %v1104
    %v1349 = vpack.c.b16 %v1113, %v1109
    %v1350 = vpack.c.b16 %v1114, %v1110
    %v1351 = vpack.c.b16 %v1115, %v1111
    %v1352 = vpack.c.b16 %v1116, %v1112
    %v1353 = vpack.c.b16 %v1121, %v1117
    %v1354 = vpack.c.b16 %v1122, %v1118
    %v1355 = vpack.c.b16 %v1123, %v1119
    %v1356 = vpack.c.b16 %v1124, %v1120
    %v1357 = vpack.c.b16 %v1129, %v1125
    %v1358 = vpack.c.b16 %v1130, %v1126
    %v1359 = vpack.c.b16 %v1131, %v1127
    %v1360 = vpack.c.b16 %v1132, %v1128
    %v1361 = vpack.c.b16 %v1137, %v1133
    %v1362 = vpack.c.b16 %v1138, %v1134
    %v1363 = vpack.c.b16 %v1139, %v1135
    %v1364 = vpack.c.b16 %v1140, %v1136
    %v1365 = vpack.c.b16 %v1145, %v1141
    %v1366 = vpack.c.b16 %v1146, %v1142
    %v1367 = vpack.c.b16 %v1147, %v1143
    %v1368 = vpack.c.b16 %v1148, %v1144
    %v1369 = vpack.c.b16 %v1153, %v1149
    %v1370 = vpack.c.b16 %v1154, %v1150
    %v1371 = vpack.c.b16 %v1155, %v1151
    %v1372 = vpack.c.b16 %v1156, %v1152
    %v1373 = vpack.c.b16 %v1161, %v1157
    %v1374 = vpack.c.b16 %v1162, %v1158
    %v1375 = vpack.c.b16 %v1163, %v1159
    %v1376 = vpack.c.b16 %v1164, %v1160
    %v1377 = vpack.c.b16 %v1169, %v1165
    %v1378 = vpack.c.b16 %v1170, %v1166
    %v1379 = vpack.c.b16 %v1171, %v1167
    %v1380 = vpack.c.b16 %v1172, %v1168
    %v1381 = vpack.c.b16 %v1177, %v1173
    %v1382 = vpack.c.b16 %v1178, %v1174
    %v1383 = vpack.c.b16 %v1179, %v1175
    %v1384 = vpack.c.b16 %v1180, %v1176
    %v1385 = vpack.c.b16 %v1185, %v1181
    %v1386 = vpack.c.b16 %v1186, %v1182
    %v1387 = vpack.c.b16 %v1187, %v1183
    %v1388 = vpack.c.b16 %v1188, %v1184
    %v1389 = vpack.c.b16 %v1193, %v1189
    %v1390 = vpack.c.b16 %v1194, %v1190
    %v1391 = vpack.c.b16 %v1195, %v1191
    %v1392 = vpack.c.b16 %v1196, %v1192
    %v1393 = vpack.c.b16 %v1201, %v1197
    %v1394 = vpack.c.b16 %v1202, %v1198
    %v1395 = vpack.c.b16 %v1203, %v1199
    %v1396 = vpack.c.b16 %v1204, %v1200
    %v1397 = vpack.c.b16 %v1209, %v1205
    %v1398 = vpack.c.b16 %v1210, %v1206
    %v1399 = vpack.c.b16 %v1211, %v1207
    %v1400 = vpack.c.b16 %v1212, %v1208
    %v1401 = vpack.c.b16 %v1217, %v1213
    %v1402 = vpack.c.b16 %v1218, %v1214
    %v1403 = vpack.c.b16 %v1219, %v1215
    %v1404 = vpack.c.b16 %v1220, %v1216
    %v1405 = vpack.c.b16 %v1225, %v1221
    %v1406 = vpack.c.b16 %v1226, %v1222
    %v1407 = vpack.c.b16 %v1227, %v1223
    %v1408 = vpack.c.b16 %v1228, %v1224
    %v1409 = vpack.c.b16 %v1233, %v1229
    %v1410 = vpack.c.b16 %v1234, %v1230
    %v1411 = vpack.c.b16 %v1235, %v1231
    %v1412 = vpack.c.b16 %v1236, %v1232
    %v1413 = vpack.c.b16 %v1241, %v1237
    %v1414 = vpack.c.b16 %v1242, %v1238
    %v1415 = vpack.c.b16 %v1243, %v1239
    %v1416 = vpack.c.b16 %v1244, %v1240
    %v1417 = vpack.c.b16 %v1249, %v1245
    %v1418 = vpack.c.b16 %v1250, %v1246
    %v1419 = vpack.c.b16 %v1251, %v1247
    %v1420 = vpack.c.b16 %v1252, %v1248
    %v1421 = vpack.c.b16 %v1257, %v1253
    %v1422 = vpack.c.b16 %v1258, %v1254
    %v1423 = vpack.c.b16 %v1259, %v1255
    %v1424 = vpack.c.b16 %v1260, %v1256
    %v1425 = vpack.c.b16 %v1265, %v1261
    %v1426 = vpack.c.b16 %v1266, %v1262
    %v1427 = vpack.c.b16 %v1267, %v1263
    %v1428 = vpack.c.b16 %v1268, %v1264
    %v1429 = vpack.c.b16 %v1273, %v1269
    %v1430 = vpack.c.b16 %v1274, %v1270
    %v1431 = vpack.c.b16 %v1275, %v1271
    %v1432 = vpack.c.b16 %v1276, %v1272
    %v1433 = vpack.c.b16 %v1281, %v1277
    %v1434 = vpack.c.b16 %v1282, %v1278
    %v1435 = vpack.c.b16 %v1283, %v1279
    %v1436 = vpack.c.b16 %v1284, %v1280
    %v1437 = vpack.c.b16 %v1289, %v1285
    %v1438 = vpack.c.b16 %v1290, %v1286
    %v1439 = vpack.c.b16 %v1291, %v1287
    %v1440 = vpack.c.b16 %v1292, %v1288
    %v1441 = vpack.c.b16 %v1297, %v1293
    %v1442 = vpack.c.b16 %v1298, %v1294
    %v1443 = vpack.c.b16 %v1299, %v1295
    %v1444 = vpack.c.b16 %v1300, %v1296
    %v1445 = vpack.c.b16 %v1305, %v1301
    %v1446 = vpack.c.b16 %v1306, %v1302
    %v1447 = vpack.c.b16 %v1307, %v1303
    %v1448 = vpack.c.b16 %v1308, %v1304
    %v1449 = vpack.c.b16 %v1313, %v1309
    %v1450 = vpack.c.b16 %v1314, %v1310
    %v1451 = vpack.c.b16 %v1315, %v1311
    %v1452 = vpack.c.b16 %v1316, %v1312
    %v1453 = vpack.c.b16 %v1321, %v1317
    %v1454 = vpack.c.b16 %v1322, %v1318
    %v1455 = vpack.c.b16 %v1323, %v1319
    %v1456 = vpack.c.b16 %v1324, %v1320
    %v1457 = vpack.c.b16 %v1329, %v1325
    %v1458 = vpack.c.b16 %v1330, %v1326
    %v1459 = vpack.c.b16 %v1331, %v1327
    %v1460 = vpack.c.b16 %v1332, %v1328
    %1589 = vmatprep.subr.bf16.mxu0 %v1334
    %1590 = vmatpush1.bf16.msra.mxu0 %v1333
    %1591 = vmatprep.subr.bf16.mxu0 %v1338
    %1592 = vmatpush1.bf16.msra.mxu0 %v1337
    %1593 = vmatprep.subr.bf16.mxu0 %v1342
    %1594 = vmatpush1.bf16.msra.mxu0 %v1341
    %1595 = vmatprep.subr.bf16.mxu0 %v1346
    %1596 = vmatpush1.bf16.msra.mxu0 %v1345
    %1597 = vmatprep.subr.bf16.mxu0 %v1350
    %1598 = vmatpush1.bf16.msra.mxu0 %v1349
    %1599 = vmatprep.subr.bf16.mxu0 %v1354
    %1600 = vmatpush1.bf16.msra.mxu0 %v1353
    %1601 = vmatprep.subr.bf16.mxu0 %v1358
    %1602 = vmatpush1.bf16.msra.mxu0 %v1357
    %1603 = vmatprep.subr.bf16.mxu0 %v1362
    %1604 = vmatpush1.bf16.msra.mxu0 %v1361
    %1605 = vmatprep.subr.bf16.mxu0 %v1366
    %1606 = vmatpush1.bf16.msra.mxu0 %v1365
    %1607 = vmatprep.subr.bf16.mxu0 %v1370
    %1608 = vmatpush1.bf16.msra.mxu0 %v1369
    %1609 = vmatprep.subr.bf16.mxu0 %v1374
    %1610 = vmatpush1.bf16.msra.mxu0 %v1373
    %1611 = vmatprep.subr.bf16.mxu0 %v1378
    %1612 = vmatpush1.bf16.msra.mxu0 %v1377
    %1613 = vmatprep.subr.bf16.mxu0 %v1382
    %1614 = vmatpush1.bf16.msra.mxu0 %v1381
    %1615 = vmatprep.subr.bf16.mxu0 %v1386
    %1616 = vmatpush1.bf16.msra.mxu0 %v1385
    %1617 = vmatprep.subr.bf16.mxu0 %v1390
    %1618 = vmatpush1.bf16.msra.mxu0 %v1389
    %1619 = vmatprep.subr.bf16.mxu0 %v1394
    %1620 = vmatpush1.bf16.msra.mxu0 %v1393
    %1621 = vmatprep.mubr.bf16.mxu0 %v796
    %1622 = vmatmul.mubr.bf16.gmra.mrb[0].mxu0 %v795
    %v1623 = vpop.f32.mrb[0].mxu0
    %v1624 = vadd.f32 %v932, %v1623
    %v1625 = vpop.f32.mrb[0].mxu0
    %v1626 = vadd.f32 %v936, %v1625
    %v1627 = vpop.f32.mrb[0].mxu0
    %v1628 = vpop.f32.mrb[0].mxu0
    %1629 = vdwg.mxu0
    %1630 = vmatprep.subr.bf16.mxu0 %v1398
    %1631 = vmatpush1.bf16.msra.mxu0 %v1397
    %1632 = vmatprep.subr.bf16.mxu0 %v1402
    %1633 = vmatpush1.bf16.msra.mxu0 %v1401
    %1634 = vmatprep.subr.bf16.mxu0 %v1406
    %1635 = vmatpush1.bf16.msra.mxu0 %v1405
    %1636 = vmatprep.subr.bf16.mxu0 %v1410
    %1637 = vmatpush1.bf16.msra.mxu0 %v1409
    %1638 = vmatprep.subr.bf16.mxu0 %v1414
    %1639 = vmatpush1.bf16.msra.mxu0 %v1413
    %1640 = vmatprep.subr.bf16.mxu0 %v1418
    %1641 = vmatpush1.bf16.msra.mxu0 %v1417
    %1642 = vmatprep.subr.bf16.mxu0 %v1422
    %1643 = vmatpush1.bf16.msra.mxu0 %v1421
    %1644 = vmatprep.subr.bf16.mxu0 %v1426
    %1645 = vmatpush1.bf16.msra.mxu0 %v1425
    %1646 = vmatprep.subr.bf16.mxu0 %v1430
    %1647 = vmatpush1.bf16.msra.mxu0 %v1429
    %1648 = vmatprep.subr.bf16.mxu0 %v1434
    %1649 = vmatpush1.bf16.msra.mxu0 %v1433
    %1650 = vmatprep.subr.bf16.mxu0 %v1438
    %1651 = vmatpush1.bf16.msra.mxu0 %v1437
    %1652 = vmatprep.subr.bf16.mxu0 %v1442
    %1653 = vmatpush1.bf16.msra.mxu0 %v1441
    %1654 = vmatprep.subr.bf16.mxu0 %v1446
    %1655 = vmatpush1.bf16.msra.mxu0 %v1445
    %1656 = vmatprep.subr.bf16.mxu0 %v1450
    %1657 = vmatpush1.bf16.msra.mxu0 %v1449
    %1658 = vmatprep.subr.bf16.mxu0 %v1454
    %1659 = vmatpush1.bf16.msra.mxu0 %v1453
    %1660 = vmatprep.subr.bf16.mxu0 %v1458
    %1661 = vmatpush1.bf16.msra.mxu0 %v1457
    %1662 = vmatprep.mubr.bf16.mxu0 %v798
    %1663 = vmatmul.mubr.bf16.gmra.mrb[0].mxu0 %v797
    %v1664 = vpop.f32.mrb[0].mxu0
    %v1665 = vadd.f32 %v1624, %v1664
    %v1666 = vpop.f32.mrb[0].mxu0
    %v1667 = vadd.f32 %v1626, %v1666
    %v1668 = vpop.f32.mrb[0].mxu0
    %v1669 = vpop.f32.mrb[0].mxu0
    %1670 = vdwg.mxu0
    %1671 = vmatprep.subr.bf16.mxu0 %v1336
    %1672 = vmatpush1.bf16.msra.mxu0 %v1335
    %1673 = vmatprep.subr.bf16.mxu0 %v1340
    %1674 = vmatpush1.bf16.msra.mxu0 %v1339
    %1675 = vmatprep.subr.bf16.mxu0 %v1344
    %1676 = vmatpush1.bf16.msra.mxu0 %v1343
    %1677 = vmatprep.subr.bf16.mxu0 %v1348
    %1678 = vmatpush1.bf16.msra.mxu0 %v1347
    %1679 = vmatprep.subr.bf16.mxu0 %v1352
    %1680 = vmatpush1.bf16.msra.mxu0 %v1351
    %1681 = vmatprep.subr.bf16.mxu0 %v1356
    %1682 = vmatpush1.bf16.msra.mxu0 %v1355
    %1683 = vmatprep.subr.bf16.mxu0 %v1360
    %1684 = vmatpush1.bf16.msra.mxu0 %v1359
    %1685 = vmatprep.subr.bf16.mxu0 %v1364
    %1686 = vmatpush1.bf16.msra.mxu0 %v1363
    %1687 = vmatprep.subr.bf16.mxu0 %v1368
    %1688 = vmatpush1.bf16.msra.mxu0 %v1367
    %1689 = vmatprep.subr.bf16.mxu0 %v1372
    %1690 = vmatpush1.bf16.msra.mxu0 %v1371
    %1691 = vmatprep.subr.bf16.mxu0 %v1376
    %1692 = vmatpush1.bf16.msra.mxu0 %v1375
    %1693 = vmatprep.subr.bf16.mxu0 %v1380
    %1694 = vmatpush1.bf16.msra.mxu0 %v1379
    %1695 = vmatprep.subr.bf16.mxu0 %v1384
    %1696 = vmatpush1.bf16.msra.mxu0 %v1383
    %1697 = vmatprep.subr.bf16.mxu0 %v1388
    %1698 = vmatpush1.bf16.msra.mxu0 %v1387
    %1699 = vmatprep.subr.bf16.mxu0 %v1392
    %1700 = vmatpush1.bf16.msra.mxu0 %v1391
    %1701 = vmatprep.subr.bf16.mxu0 %v1396
    %1702 = vmatpush1.bf16.msra.mxu0 %v1395
    %1703 = vmatprep.mubr.bf16.mxu0 %v796
    %1704 = vmatmul.mubr.bf16.gmra.mrb[0].mxu0 %v795
    %v1705 = vpop.f32.mrb[0].mxu0
    %v1706 = vadd.f32 %v940, %v1705
    %v1707 = vpop.f32.mrb[0].mxu0
    %v1708 = vadd.f32 %v944, %v1707
    %v1709 = vpop.f32.mrb[0].mxu0
    %v1710 = vpop.f32.mrb[0].mxu0
    %1711 = vdwg.mxu0
    %1712 = vmatprep.subr.bf16.mxu0 %v1400
    %1713 = vmatpush1.bf16.msra.mxu0 %v1399
    %1714 = vmatprep.subr.bf16.mxu0 %v1404
    %1715 = vmatpush1.bf16.msra.mxu0 %v1403
    %1716 = vmatprep.subr.bf16.mxu0 %v1408
    %1717 = vmatpush1.bf16.msra.mxu0 %v1407
    %1718 = vmatprep.subr.bf16.mxu0 %v1412
    %1719 = vmatpush1.bf16.msra.mxu0 %v1411
    %1720 = vmatprep.subr.bf16.mxu0 %v1416
    %1721 = vmatpush1.bf16.msra.mxu0 %v1415
    %1722 = vmatprep.subr.bf16.mxu0 %v1420
    %1723 = vmatpush1.bf16.msra.mxu0 %v1419
    %1724 = vmatprep.subr.bf16.mxu0 %v1424
    %1725 = vmatpush1.bf16.msra.mxu0 %v1423
    %1726 = vmatprep.subr.bf16.mxu0 %v1428
    %1727 = vmatpush1.bf16.msra.mxu0 %v1427
    %1728 = vmatprep.subr.bf16.mxu0 %v1432
    %1729 = vmatpush1.bf16.msra.mxu0 %v1431
    %1730 = vmatprep.subr.bf16.mxu0 %v1436
    %1731 = vmatpush1.bf16.msra.mxu0 %v1435
    %1732 = vmatprep.subr.bf16.mxu0 %v1440
    %1733 = vmatpush1.bf16.msra.mxu0 %v1439
    %1734 = vmatprep.subr.bf16.mxu0 %v1444
    %1735 = vmatpush1.bf16.msra.mxu0 %v1443
    %1736 = vmatprep.subr.bf16.mxu0 %v1448
    %1737 = vmatpush1.bf16.msra.mxu0 %v1447
    %1738 = vmatprep.subr.bf16.mxu0 %v1452
    %1739 = vmatpush1.bf16.msra.mxu0 %v1451
    %1740 = vmatprep.subr.bf16.mxu0 %v1456
    %1741 = vmatpush1.bf16.msra.mxu0 %v1455
    %1742 = vmatprep.subr.bf16.mxu0 %v1460
    %1743 = vmatpush1.bf16.msra.mxu0 %v1459
    %1744 = vmatprep.mubr.bf16.mxu0 %v798
    %1745 = vmatmul.mubr.bf16.gmra.mrb[0].mxu0 %v797
    %v1746 = vpop.f32.mrb[0].mxu0
    %v1747 = vadd.f32 %v1706, %v1746
    %v1748 = vpop.f32.mrb[0].mxu0
    %v1749 = vadd.f32 %v1708, %v1748
    %v1750 = vpop.f32.mrb[0].mxu0
    %v1751 = vpop.f32.mrb[0].mxu0
    %1752 = vdwg.mxu0
    %v1753 = vand.u32 2147483647, %v1665
    %vm1754 = vcmp.le.f32.partialorder %v1753, 0.7853982
    %vm1755 = vcmp.lt.s32.totalorder %v1665, 0
    %v1756 = vand.u32 %v1665, 2139095040
    %v1757 = vshrl.u32 %v1756, 23
    %v1758 = vsub.s32 %v1757, 127
    %v1759 = vand.u32 2147483647, %v1665
    %v1760 = vand.u32 %v1759, 8388607
    %v1761 = vor.u32 %v1760, 8388608
    %v1762 = vsub.s32 0, %v1761
    %v1763 = vadd.s32 %v1758, 1
    %vm1764 = vcmp.gt.s32.totalorder %v1763, 0
    %v1765 = vsel %vm1764, %v1763, 0
    %v1766 = vshrl.u32 %v1765, 5
    %v1767 = vand.u32 %v1765, 31
    %v1768 = vsub.s32 32, %v1767
    %v1769 = vshrl.u32 683565275, %v1768
    %v1770 = vshll.u32 683565275, %v1767
    %v1771 = vshrl.u32 2475754826, %v1768
    %v1772 = vor.u32 %v1770, %v1771
    %v1773 = vshll.u32 2475754826, %v1767
    %v1774 = vshrl.u32 2131351028, %v1768
    %v1775 = vor.u32 %v1773, %v1774
    %v1776 = vshll.u32 2131351028, %v1767
    %v1777 = vshrl.u32 2102212464, %v1768
    %v1778 = vor.u32 %v1776, %v1777
    %v1779 = vshll.u32 2102212464, %v1767
    %v1780 = vshrl.u32 920167782, %v1768
    %v1781 = vor.u32 %v1779, %v1780
    %v1782 = vshll.u32 920167782, %v1767
    %v1783 = vshrl.u32 1326507024, %v1768
    %v1784 = vor.u32 %v1782, %v1783
    %vm1785 = vcmp.lt.s32.totalorder %v1766, 1
    %vm1786 = vcmp.lt.s32.totalorder %v1766, 2
    %vm1787 = vcmp.lt.s32.totalorder %v1766, 3
    %vm1788 = vcmp.lt.s32.totalorder %v1766, 4
    %v1789 = vsel %vm1785, %v1769, %v1772
    %v1790 = vsel %vm1788, %v1778, 2102212464
    %v1791 = vsel %vm1787, %v1775, %v1790
    %v1792 = vsel %vm1786, %v1789, %v1791
    %v1793 = vsel %vm1785, %v1772, %v1775
    %v1794 = vsel %vm1788, %v1781, 920167782
    %v1795 = vsel %vm1787, %v1778, %v1794
    %v1796 = vsel %vm1786, %v1793, %v1795
    %v1797 = vsel %vm1785, %v1775, %v1778
    %v1798 = vsel %vm1788, %v1784, 1326507024
    %v1799 = vsel %vm1787, %v1781, %v1798
    %v1800 = vsel %vm1786, %v1797, %v1799
    %v1801 = vshll.u32 %v1761, 8
    %v1802 = vmul.u32.u64.compose %v1801, %v1800
    %v1803 = vextract.low.u32 %v1802
    %v1804 = vextract.high.u32 %v1802
    %v1805 = vmul.u32.u64.compose %v1801, %v1796
    %v1806 = vextract.low.u32 %v1805
    %v1807 = vextract.high.u32 %v1805
    %v1808 = vmul.u32 %v1801, %v1792
    %v1809 = vadd.s32 %v1804, %v1806
    %vm1810 = vc.u32 %v1804, %v1806
    %v1811 = vadd.s32 %v1807, 1
    %v1812 = vsel %vm1810, %v1811, %v1807
    %v1813 = vadd.s32 %v1808, %v1812
    %v1814 = vadd.s32 %v1813, 536870912
    %v1815 = vshrl.u32 %v1814, 30
    %v1816 = vshll.u32 %v1815, 30
    %v1817 = vsub.s32 %v1813, %v1816
    %vm1818 = vcmp.lt.s32.totalorder %v1817, 0
    %v1819 = vsub.s32 0, %v1817
    %v1820 = vsel %vm1818, %v1819, %v1817
    %v1821 = vclz %v1820
    %v1822 = vsub.s32 %v1821, 2
    %vm1823 = vcmp.gt.s32.totalorder 0, %v1822
    %v1824 = vsel %vm1823, 0, %v1822
    %v1825 = vsub.s32 32, %v1824
    %v1826 = vshll.u32 %v1817, %v1824
    %v1827 = vshrl.u32 %v1809, %v1825
    %v1828 = vor.u32 %v1826, %v1827
    %v1829 = vsub.s32 4294967266, %v1824
    %v1830 = vadd.s32 %v1829, 127
    %v1831 = vshll.u32 %v1830, 23
    %v1832 = vor.u32 4788187, %v1831
    %v1833 = vand.u32 2147483647, %v1832
    %v1835 = vcvt.s32.f32 %v1828
    %v1836 = vmul.f32 %v1835, %v1833
    %v1837 = vxor.u32 %v1836, 2147483648
    %v1838 = vsel %vm1755, %v1837, %v1836
    %v1839 = vsub.s32 4, %v1815
    %v1840 = vsel %vm1755, %v1839, %v1815
    %v1841 = vsel %vm1754, %v1665, %v1838
    %v1842 = vsel %vm1754, 0, %v1840
    %v1843 = vcosq.f32.pop %v1841
    %v1844 = vsinq.f32.pop %v1841
    %vm1845 = vweird.f32 %v1665
    %v1846 = vadd.s32 %v1842, 3
    %v1847 = vand.u32 %v1846, 3
    %vm1848 = vcmp.lt.s32.totalorder %v1847, 2
    %vm1849 = vcmp.eq.s32.totalorder %v1847, 0
    %v1850 = vxor.u32 %v1844, 2147483648
    %v1851 = vsel %vm1849, %v1843, %v1850
    %vm1852 = vcmp.eq.s32.totalorder %v1847, 2
    %v1853 = vxor.u32 %v1843, 2147483648
    %v1854 = vsel %vm1852, %v1853, %v1844
    %v1855 = vsel %vm1848, %v1851, %v1854
    %v1856 = vsel %vm1845, nan, %v1855
    %v1857 = vand.u32 2147483647, %v1667
    %vm1858 = vcmp.le.f32.partialorder %v1857, 0.7853982
    %vm1859 = vcmp.lt.s32.totalorder %v1667, 0
    %v1860 = vand.u32 %v1667, 2139095040
    %v1861 = vshrl.u32 %v1860, 23
    %v1862 = vsub.s32 %v1861, 127
    %v1863 = vand.u32 2147483647, %v1667
    %v1864 = vand.u32 %v1863, 8388607
    %v1865 = vor.u32 %v1864, 8388608
    %v1866 = vsub.s32 0, %v1865
    %v1867 = vadd.s32 %v1862, 1
    %vm1868 = vcmp.gt.s32.totalorder %v1867, 0
    %v1869 = vsel %vm1868, %v1867, 0
    %v1870 = vshrl.u32 %v1869, 5
    %v1871 = vand.u32 %v1869, 31
    %v1872 = vsub.s32 32, %v1871
    %v1873 = vshrl.u32 683565275, %v1872
    %v1874 = vshll.u32 683565275, %v1871
    %v1875 = vshrl.u32 2475754826, %v1872
    %v1876 = vor.u32 %v1874, %v1875
    %v1877 = vshll.u32 2475754826, %v1871
    %v1878 = vshrl.u32 2131351028, %v1872
    %v1879 = vor.u32 %v1877, %v1878
    %v1880 = vshll.u32 2131351028, %v1871
    %v1881 = vshrl.u32 2102212464, %v1872
    %v1882 = vor.u32 %v1880, %v1881
    %v1883 = vshll.u32 2102212464, %v1871
    %v1884 = vshrl.u32 920167782, %v1872
    %v1885 = vor.u32 %v1883, %v1884
    %v1886 = vshll.u32 920167782, %v1871
    %v1887 = vshrl.u32 1326507024, %v1872
    %v1888 = vor.u32 %v1886, %v1887
    %vm1889 = vcmp.lt.s32.totalorder %v1870, 1
    %vm1890 = vcmp.lt.s32.totalorder %v1870, 2
    %vm1891 = vcmp.lt.s32.totalorder %v1870, 3
    %vm1892 = vcmp.lt.s32.totalorder %v1870, 4
    %v1893 = vsel %vm1889, %v1873, %v1876
    %v1894 = vsel %vm1892, %v1882, 2102212464
    %v1895 = vsel %vm1891, %v1879, %v1894
    %v1896 = vsel %vm1890, %v1893, %v1895
    %v1897 = vsel %vm1889, %v1876, %v1879
    %v1898 = vsel %vm1892, %v1885, 920167782
    %v1899 = vsel %vm1891, %v1882, %v1898
    %v1900 = vsel %vm1890, %v1897, %v1899
    %v1901 = vsel %vm1889, %v1879, %v1882
    %v1902 = vsel %vm1892, %v1888, 1326507024
    %v1903 = vsel %vm1891, %v1885, %v1902
    %v1904 = vsel %vm1890, %v1901, %v1903
    %v1905 = vshll.u32 %v1865, 8
    %v1906 = vmul.u32.u64.compose %v1905, %v1904
    %v1907 = vextract.low.u32 %v1906
    %v1908 = vextract.high.u32 %v1906
    %v1909 = vmul.u32.u64.compose %v1905, %v1900
    %v1910 = vextract.low.u32 %v1909
    %v1911 = vextract.high.u32 %v1909
    %v1912 = vmul.u32 %v1905, %v1896
    %v1913 = vadd.s32 %v1908, %v1910
    %vm1914 = vc.u32 %v1908, %v1910
    %v1915 = vadd.s32 %v1911, 1
    %v1916 = vsel %vm1914, %v1915, %v1911
    %v1917 = vadd.s32 %v1912, %v1916
    %v1918 = vadd.s32 %v1917, 536870912
    %v1919 = vshrl.u32 %v1918, 30
    %v1920 = vshll.u32 %v1919, 30
    %v1921 = vsub.s32 %v1917, %v1920
    %vm1922 = vcmp.lt.s32.totalorder %v1921, 0
    %v1923 = vsub.s32 0, %v1921
    %v1924 = vsel %vm1922, %v1923, %v1921
    %v1925 = vclz %v1924
    %v1926 = vsub.s32 %v1925, 2
    %vm1927 = vcmp.gt.s32.totalorder 0, %v1926
    %v1928 = vsel %vm1927, 0, %v1926
    %v1929 = vsub.s32 32, %v1928
    %v1930 = vshll.u32 %v1921, %v1928
    %v1931 = vshrl.u32 %v1913, %v1929
    %v1932 = vor.u32 %v1930, %v1931
    %v1933 = vsub.s32 4294967266, %v1928
    %v1934 = vadd.s32 %v1933, 127
    %v1935 = vshll.u32 %v1934, 23
    %v1936 = vor.u32 4788187, %v1935
    %v1937 = vand.u32 2147483647, %v1936
    %v1939 = vcvt.s32.f32 %v1932
    %v1940 = vmul.f32 %v1939, %v1937
    %v1941 = vxor.u32 %v1940, 2147483648
    %v1942 = vsel %vm1859, %v1941, %v1940
    %v1943 = vsub.s32 4, %v1919
    %v1944 = vsel %vm1859, %v1943, %v1919
    %v1945 = vsel %vm1858, %v1667, %v1942
    %v1946 = vsel %vm1858, 0, %v1944
    %v1947 = vcosq.f32.pop %v1945
    %v1948 = vsinq.f32.pop %v1945
    %vm1949 = vweird.f32 %v1667
    %v1950 = vadd.s32 %v1946, 3
    %v1951 = vand.u32 %v1950, 3
    %vm1952 = vcmp.lt.s32.totalorder %v1951, 2
    %vm1953 = vcmp.eq.s32.totalorder %v1951, 0
    %v1954 = vxor.u32 %v1948, 2147483648
    %v1955 = vsel %vm1953, %v1947, %v1954
    %vm1956 = vcmp.eq.s32.totalorder %v1951, 2
    %v1957 = vxor.u32 %v1947, 2147483648
    %v1958 = vsel %vm1956, %v1957, %v1948
    %v1959 = vsel %vm1952, %v1955, %v1958
    %v1960 = vsel %vm1949, nan, %v1959
    %v1961 = vand.u32 2147483647, %v1747
    %vm1962 = vcmp.le.f32.partialorder %v1961, 0.7853982
    %vm1963 = vcmp.lt.s32.totalorder %v1747, 0
    %v1964 = vand.u32 %v1747, 2139095040
    %v1965 = vshrl.u32 %v1964, 23
    %v1966 = vsub.s32 %v1965, 127
    %v1967 = vand.u32 2147483647, %v1747
    %v1968 = vand.u32 %v1967, 8388607
    %v1969 = vor.u32 %v1968, 8388608
    %v1970 = vsub.s32 0, %v1969
    %v1971 = vadd.s32 %v1966, 1
    %vm1972 = vcmp.gt.s32.totalorder %v1971, 0
    %v1973 = vsel %vm1972, %v1971, 0
    %v1974 = vshrl.u32 %v1973, 5
    %v1975 = vand.u32 %v1973, 31
    %v1976 = vsub.s32 32, %v1975
    %v1977 = vshrl.u32 683565275, %v1976
    %v1978 = vshll.u32 683565275, %v1975
    %v1979 = vshrl.u32 2475754826, %v1976
    %v1980 = vor.u32 %v1978, %v1979
    %v1981 = vshll.u32 2475754826, %v1975
    %v1982 = vshrl.u32 2131351028, %v1976
    %v1983 = vor.u32 %v1981, %v1982
    %v1984 = vshll.u32 2131351028, %v1975
    %v1985 = vshrl.u32 2102212464, %v1976
    %v1986 = vor.u32 %v1984, %v1985
    %v1987 = vshll.u32 2102212464, %v1975
    %v1988 = vshrl.u32 920167782, %v1976
    %v1989 = vor.u32 %v1987, %v1988
    %v1990 = vshll.u32 920167782, %v1975
    %v1991 = vshrl.u32 1326507024, %v1976
    %v1992 = vor.u32 %v1990, %v1991
    %vm1993 = vcmp.lt.s32.totalorder %v1974, 1
    %vm1994 = vcmp.lt.s32.totalorder %v1974, 2
    %vm1995 = vcmp.lt.s32.totalorder %v1974, 3
    %vm1996 = vcmp.lt.s32.totalorder %v1974, 4
    %v1997 = vsel %vm1993, %v1977, %v1980
    %v1998 = vsel %vm1996, %v1986, 2102212464
    %v1999 = vsel %vm1995, %v1983, %v1998
    %v2000 = vsel %vm1994, %v1997, %v1999
    %v2001 = vsel %vm1993, %v1980, %v1983
    %v2002 = vsel %vm1996, %v1989, 920167782
    %v2003 = vsel %vm1995, %v1986, %v2002
    %v2004 = vsel %vm1994, %v2001, %v2003
    %v2005 = vsel %vm1993, %v1983, %v1986
    %v2006 = vsel %vm1996, %v1992, 1326507024
    %v2007 = vsel %vm1995, %v1989, %v2006
    %v2008 = vsel %vm1994, %v2005, %v2007
    %v2009 = vshll.u32 %v1969, 8
    %v2010 = vmul.u32.u64.compose %v2009, %v2008
    %v2011 = vextract.low.u32 %v2010
    %v2012 = vextract.high.u32 %v2010
    %v2013 = vmul.u32.u64.compose %v2009, %v2004
    %v2014 = vextract.low.u32 %v2013
    %v2015 = vextract.high.u32 %v2013
    %v2016 = vmul.u32 %v2009, %v2000
    %v2017 = vadd.s32 %v2012, %v2014
    %vm2018 = vc.u32 %v2012, %v2014
    %v2019 = vadd.s32 %v2015, 1
    %v2020 = vsel %vm2018, %v2019, %v2015
    %v2021 = vadd.s32 %v2016, %v2020
    %v2022 = vadd.s32 %v2021, 536870912
    %v2023 = vshrl.u32 %v2022, 30
    %v2024 = vshll.u32 %v2023, 30
    %v2025 = vsub.s32 %v2021, %v2024
    %vm2026 = vcmp.lt.s32.totalorder %v2025, 0
    %v2027 = vsub.s32 0, %v2025
    %v2028 = vsel %vm2026, %v2027, %v2025
    %v2029 = vclz %v2028
    %v2030 = vsub.s32 %v2029, 2
    %vm2031 = vcmp.gt.s32.totalorder 0, %v2030
    %v2032 = vsel %vm2031, 0, %v2030
    %v2033 = vsub.s32 32, %v2032
    %v2034 = vshll.u32 %v2025, %v2032
    %v2035 = vshrl.u32 %v2017, %v2033
    %v2036 = vor.u32 %v2034, %v2035
    %v2037 = vsub.s32 4294967266, %v2032
    %v2038 = vadd.s32 %v2037, 127
    %v2039 = vshll.u32 %v2038, 23
    %v2040 = vor.u32 4788187, %v2039
    %v2041 = vand.u32 2147483647, %v2040
    %v2043 = vcvt.s32.f32 %v2036
    %v2044 = vmul.f32 %v2043, %v2041
    %v2045 = vxor.u32 %v2044, 2147483648
    %v2046 = vsel %vm1963, %v2045, %v2044
    %v2047 = vsub.s32 4, %v2023
    %v2048 = vsel %vm1963, %v2047, %v2023
    %v2049 = vsel %vm1962, %v1747, %v2046
    %v2050 = vsel %vm1962, 0, %v2048
    %v2051 = vcosq.f32.pop %v2049
    %v2052 = vsinq.f32.pop %v2049
    %vm2053 = vweird.f32 %v1747
    %v2054 = vadd.s32 %v2050, 3
    %v2055 = vand.u32 %v2054, 3
    %vm2056 = vcmp.lt.s32.totalorder %v2055, 2
    %vm2057 = vcmp.eq.s32.totalorder %v2055, 0
    %v2058 = vxor.u32 %v2052, 2147483648
    %v2059 = vsel %vm2057, %v2051, %v2058
    %vm2060 = vcmp.eq.s32.totalorder %v2055, 2
    %v2061 = vxor.u32 %v2051, 2147483648
    %v2062 = vsel %vm2060, %v2061, %v2052
    %v2063 = vsel %vm2056, %v2059, %v2062
    %v2064 = vsel %vm2053, nan, %v2063
    %v2065 = vand.u32 2147483647, %v1749
    %vm2066 = vcmp.le.f32.partialorder %v2065, 0.7853982
    %vm2067 = vcmp.lt.s32.totalorder %v1749, 0
    %v2068 = vand.u32 %v1749, 2139095040
    %v2069 = vshrl.u32 %v2068, 23
    %v2070 = vsub.s32 %v2069, 127
    %v2071 = vand.u32 2147483647, %v1749
    %v2072 = vand.u32 %v2071, 8388607
    %v2073 = vor.u32 %v2072, 8388608
    %v2074 = vsub.s32 0, %v2073
    %v2075 = vadd.s32 %v2070, 1
    %vm2076 = vcmp.gt.s32.totalorder %v2075, 0
    %v2077 = vsel %vm2076, %v2075, 0
    %v2078 = vshrl.u32 %v2077, 5
    %v2079 = vand.u32 %v2077, 31
    %v2080 = vsub.s32 32, %v2079
    %v2081 = vshrl.u32 683565275, %v2080
    %v2082 = vshll.u32 683565275, %v2079
    %v2083 = vshrl.u32 2475754826, %v2080
    %v2084 = vor.u32 %v2082, %v2083
    %v2085 = vshll.u32 2475754826, %v2079
    %v2086 = vshrl.u32 2131351028, %v2080
    %v2087 = vor.u32 %v2085, %v2086
    %v2088 = vshll.u32 2131351028, %v2079
    %v2089 = vshrl.u32 2102212464, %v2080
    %v2090 = vor.u32 %v2088, %v2089
    %v2091 = vshll.u32 2102212464, %v2079
    %v2092 = vshrl.u32 920167782, %v2080
    %v2093 = vor.u32 %v2091, %v2092
    %v2094 = vshll.u32 920167782, %v2079
    %v2095 = vshrl.u32 1326507024, %v2080
    %v2096 = vor.u32 %v2094, %v2095
    %vm2097 = vcmp.lt.s32.totalorder %v2078, 1
    %vm2098 = vcmp.lt.s32.totalorder %v2078, 2
    %vm2099 = vcmp.lt.s32.totalorder %v2078, 3
    %vm2100 = vcmp.lt.s32.totalorder %v2078, 4
    %v2101 = vsel %vm2097, %v2081, %v2084
    %v2102 = vsel %vm2100, %v2090, 2102212464
    %v2103 = vsel %vm2099, %v2087, %v2102
    %v2104 = vsel %vm2098, %v2101, %v2103
    %v2105 = vsel %vm2097, %v2084, %v2087
    %v2106 = vsel %vm2100, %v2093, 920167782
    %v2107 = vsel %vm2099, %v2090, %v2106
    %v2108 = vsel %vm2098, %v2105, %v2107
    %v2109 = vsel %vm2097, %v2087, %v2090
    %v2110 = vsel %vm2100, %v2096, 1326507024
    %v2111 = vsel %vm2099, %v2093, %v2110
    %v2112 = vsel %vm2098, %v2109, %v2111
    %v2113 = vshll.u32 %v2073, 8
    %v2114 = vmul.u32.u64.compose %v2113, %v2112
    %v2115 = vextract.low.u32 %v2114
    %v2116 = vextract.high.u32 %v2114
    %v2117 = vmul.u32.u64.compose %v2113, %v2108
    %v2118 = vextract.low.u32 %v2117
    %v2119 = vextract.high.u32 %v2117
    %v2120 = vmul.u32 %v2113, %v2104
    %v2121 = vadd.s32 %v2116, %v2118
    %vm2122 = vc.u32 %v2116, %v2118
    %v2123 = vadd.s32 %v2119, 1
    %v2124 = vsel %vm2122, %v2123, %v2119
    %v2125 = vadd.s32 %v2120, %v2124
    %v2126 = vadd.s32 %v2125, 536870912
    %v2127 = vshrl.u32 %v2126, 30
    %v2128 = vshll.u32 %v2127, 30
    %v2129 = vsub.s32 %v2125, %v2128
    %vm2130 = vcmp.lt.s32.totalorder %v2129, 0
    %v2131 = vsub.s32 0, %v2129
    %v2132 = vsel %vm2130, %v2131, %v2129
    %v2133 = vclz %v2132
    %v2134 = vsub.s32 %v2133, 2
    %vm2135 = vcmp.gt.s32.totalorder 0, %v2134
    %v2136 = vsel %vm2135, 0, %v2134
    %v2137 = vsub.s32 32, %v2136
    %v2138 = vshll.u32 %v2129, %v2136
    %v2139 = vshrl.u32 %v2121, %v2137
    %v2140 = vor.u32 %v2138, %v2139
    %v2141 = vsub.s32 4294967266, %v2136
    %v2142 = vadd.s32 %v2141, 127
    %v2143 = vshll.u32 %v2142, 23
    %v2144 = vor.u32 4788187, %v2143
    %v2145 = vand.u32 2147483647, %v2144
    %v2147 = vcvt.s32.f32 %v2140
    %v2148 = vmul.f32 %v2147, %v2145
    %v2149 = vxor.u32 %v2148, 2147483648
    %v2150 = vsel %vm2067, %v2149, %v2148
    %v2151 = vsub.s32 4, %v2127
    %v2152 = vsel %vm2067, %v2151, %v2127
    %v2153 = vsel %vm2066, %v1749, %v2150
    %v2154 = vsel %vm2066, 0, %v2152
    %v2155 = vcosq.f32.pop %v2153
    %v2156 = vsinq.f32.pop %v2153
    %vm2157 = vweird.f32 %v1749
    %v2158 = vadd.s32 %v2154, 3
    %v2159 = vand.u32 %v2158, 3
    %vm2160 = vcmp.lt.s32.totalorder %v2159, 2
    %vm2161 = vcmp.eq.s32.totalorder %v2159, 0
    %v2162 = vxor.u32 %v2156, 2147483648
    %v2163 = vsel %vm2161, %v2155, %v2162
    %vm2164 = vcmp.eq.s32.totalorder %v2159, 2
    %v2165 = vxor.u32 %v2155, 2147483648
    %v2166 = vsel %vm2164, %v2165, %v2156
    %v2167 = vsel %vm2160, %v2163, %v2166
    %v2168 = vsel %vm2157, nan, %v2167
    %v2169 = vpack.c.bf16 %v1856, %v1856
    %v2170 = vpack.c.bf16 %v1960, %v1960
    %v2171 = vpack.c.bf16 %v2064, %v2064
    %v2172 = vpack.c.bf16 %v2168, %v2168
    %v2173 = vld [vmem:[#allocation8] sm:$0xf]
    %v2174 = vld [vmem:[#allocation8 + $0x4] sm:$0xf]
    %v2175 = vld [vmem:[#allocation8 + $0x8] sm:$0xf]
    %v2176 = vld [vmem:[#allocation8 + $0xc] sm:$0xf]
    %v2177 = vld [vmem:[#allocation8 + $0x10] sm:$0xf]
    %v2178 = vld [vmem:[#allocation8 + $0x14] sm:$0xf]
    %v2179 = vld [vmem:[#allocation8 + $0x18] sm:$0xf]
    %v2180 = vld [vmem:[#allocation8 + $0x1c] sm:$0xf]
    %v2181 = vld [vmem:[#allocation8 + $0x20] sm:$0xf]
    %v2182 = vld [vmem:[#allocation8 + $0x24] sm:$0xf]
    %v2183 = vld [vmem:[#allocation8 + $0x28] sm:$0xf]
    %v2184 = vld [vmem:[#allocation8 + $0x2c] sm:$0xf]
    %v2185 = vld [vmem:[#allocation8 + $0x30] sm:$0xf]
    %v2186 = vld [vmem:[#allocation8 + $0x34] sm:$0xf]
    %v2187 = vld [vmem:[#allocation8 + $0x38] sm:$0xf]
    %v2188 = vld [vmem:[#allocation8 + $0x3c] sm:$0xf]
    %v2189 = vld [vmem:[#allocation8 + $0x40] sm:$0xf]
    %v2190 = vld [vmem:[#allocation8 + $0x44] sm:$0xf]
    %v2191 = vld [vmem:[#allocation8 + $0x48] sm:$0xf]
    %v2192 = vld [vmem:[#allocation8 + $0x4c] sm:$0xf]
    %v2193 = vld [vmem:[#allocation8 + $0x50] sm:$0xf]
    %v2194 = vld [vmem:[#allocation8 + $0x54] sm:$0xf]
    %v2195 = vld [vmem:[#allocation8 + $0x58] sm:$0xf]
    %v2196 = vld [vmem:[#allocation8 + $0x5c] sm:$0xf]
    %v2197 = vld [vmem:[#allocation8 + $0x60] sm:$0xf]
    %v2198 = vld [vmem:[#allocation8 + $0x64] sm:$0xf]
    %v2199 = vld [vmem:[#allocation8 + $0x68] sm:$0xf]
    %v2200 = vld [vmem:[#allocation8 + $0x6c] sm:$0xf]
    %v2201 = vld [vmem:[#allocation8 + $0x70] sm:$0xf]
    %v2202 = vld [vmem:[#allocation8 + $0x74] sm:$0xf]
    %v2203 = vld [vmem:[#allocation8 + $0x78] sm:$0xf]
    %v2204 = vld [vmem:[#allocation8 + $0x7c] sm:$0xf]
    %v2205 = vld [vmem:[#allocation8 + $0x80] sm:$0xf]
    %v2206 = vld [vmem:[#allocation8 + $0x84] sm:$0xf]
    %v2207 = vld [vmem:[#allocation8 + $0x88] sm:$0xf]
    %v2208 = vld [vmem:[#allocation8 + $0x8c] sm:$0xf]
    %v2209 = vld [vmem:[#allocation8 + $0x90] sm:$0xf]
    %v2210 = vld [vmem:[#allocation8 + $0x94] sm:$0xf]
    %v2211 = vld [vmem:[#allocation8 + $0x98] sm:$0xf]
    %v2212 = vld [vmem:[#allocation8 + $0x9c] sm:$0xf]
    %v2213 = vld [vmem:[#allocation8 + $0xa0] sm:$0xf]
    %v2214 = vld [vmem:[#allocation8 + $0xa4] sm:$0xf]
    %v2215 = vld [vmem:[#allocation8 + $0xa8] sm:$0xf]
    %v2216 = vld [vmem:[#allocation8 + $0xac] sm:$0xf]
    %v2217 = vld [vmem:[#allocation8 + $0xb0] sm:$0xf]
    %v2218 = vld [vmem:[#allocation8 + $0xb4] sm:$0xf]
    %v2219 = vld [vmem:[#allocation8 + $0xb8] sm:$0xf]
    %v2220 = vld [vmem:[#allocation8 + $0xbc] sm:$0xf]
    %v2221 = vld [vmem:[#allocation8 + $0xc0] sm:$0xf]
    %v2222 = vld [vmem:[#allocation8 + $0xc4] sm:$0xf]
    %v2223 = vld [vmem:[#allocation8 + $0xc8] sm:$0xf]
    %v2224 = vld [vmem:[#allocation8 + $0xcc] sm:$0xf]
    %v2225 = vld [vmem:[#allocation8 + $0xd0] sm:$0xf]
    %v2226 = vld [vmem:[#allocation8 + $0xd4] sm:$0xf]
    %v2227 = vld [vmem:[#allocation8 + $0xd8] sm:$0xf]
    %v2228 = vld [vmem:[#allocation8 + $0xdc] sm:$0xf]
    %v2229 = vld [vmem:[#allocation8 + $0xe0] sm:$0xf]
    %v2230 = vld [vmem:[#allocation8 + $0xe4] sm:$0xf]
    %v2231 = vld [vmem:[#allocation8 + $0xe8] sm:$0xf]
    %v2232 = vld [vmem:[#allocation8 + $0xec] sm:$0xf]
    %v2233 = vld [vmem:[#allocation8 + $0xf0] sm:$0xf]
    %v2234 = vld [vmem:[#allocation8 + $0xf4] sm:$0xf]
    %v2235 = vld [vmem:[#allocation8 + $0xf8] sm:$0xf]
    %v2236 = vld [vmem:[#allocation8 + $0xfc] sm:$0xf]
    %v2237 = vld [vmem:[%s6] sm:$0x1]
    %v2239 = vlaneseq
    %v2240 = vshrl.u32 %v2239, 7
    %v2241 = vsub.s32 0, %v2240
    %v2242 = vrot.slane %v2237, %v2241
    %v2308 = vunpack.c.l.b16 %v2173
    %v2309 = vunpack.c.l.b16 %v2174
    %v2310 = vunpack.c.l.b16 %v2175
    %v2311 = vunpack.c.l.b16 %v2176
    %v2312 = vunpack.c.l.b16 %v2177
    %v2313 = vunpack.c.l.b16 %v2178
    %v2314 = vunpack.c.l.b16 %v2179
    %v2315 = vunpack.c.l.b16 %v2180
    %v2316 = vunpack.c.l.b16 %v2181
    %v2317 = vunpack.c.l.b16 %v2182
    %v2318 = vunpack.c.l.b16 %v2183
    %v2319 = vunpack.c.l.b16 %v2184
    %v2320 = vunpack.c.l.b16 %v2185
    %v2321 = vunpack.c.l.b16 %v2186
    %v2322 = vunpack.c.l.b16 %v2187
    %v2323 = vunpack.c.l.b16 %v2188
    %v2324 = vunpack.c.l.b16 %v2189
    %v2325 = vunpack.c.l.b16 %v2190
    %v2326 = vunpack.c.l.b16 %v2191
    %v2327 = vunpack.c.l.b16 %v2192
    %v2328 = vunpack.c.l.b16 %v2193
    %v2329 = vunpack.c.l.b16 %v2194
    %v2330 = vunpack.c.l.b16 %v2195
    %v2331 = vunpack.c.l.b16 %v2196
    %v2332 = vunpack.c.l.b16 %v2197
    %v2333 = vunpack.c.l.b16 %v2198
    %v2334 = vunpack.c.l.b16 %v2199
    %v2335 = vunpack.c.l.b16 %v2200
    %v2336 = vunpack.c.l.b16 %v2201
    %v2337 = vunpack.c.l.b16 %v2202
    %v2338 = vunpack.c.l.b16 %v2203
    %v2339 = vunpack.c.l.b16 %v2204
    %v2340 = vunpack.c.l.b16 %v2205
    %v2341 = vunpack.c.l.b16 %v2206
    %v2342 = vunpack.c.l.b16 %v2207
    %v2343 = vunpack.c.l.b16 %v2208
    %v2344 = vunpack.c.l.b16 %v2209
    %v2345 = vunpack.c.l.b16 %v2210
    %v2346 = vunpack.c.l.b16 %v2211
    %v2347 = vunpack.c.l.b16 %v2212
    %v2348 = vunpack.c.l.b16 %v2213
    %v2349 = vunpack.c.l.b16 %v2214
    %v2350 = vunpack.c.l.b16 %v2215
    %v2351 = vunpack.c.l.b16 %v2216
    %v2352 = vunpack.c.l.b16 %v2217
    %v2353 = vunpack.c.l.b16 %v2218
    %v2354 = vunpack.c.l.b16 %v2219
    %v2355 = vunpack.c.l.b16 %v2220
    %v2356 = vunpack.c.l.b16 %v2221
    %v2357 = vunpack.c.l.b16 %v2222
    %v2358 = vunpack.c.l.b16 %v2223
    %v2359 = vunpack.c.l.b16 %v2224
    %v2360 = vunpack.c.l.b16 %v2225
    %v2361 = vunpack.c.l.b16 %v2226
    %v2362 = vunpack.c.l.b16 %v2227
    %v2363 = vunpack.c.l.b16 %v2228
    %v2364 = vunpack.c.l.b16 %v2229
    %v2365 = vunpack.c.l.b16 %v2230
    %v2366 = vunpack.c.l.b16 %v2231
    %v2367 = vunpack.c.l.b16 %v2232
    %v2368 = vunpack.c.l.b16 %v2233
    %v2369 = vunpack.c.l.b16 %v2234
    %v2370 = vunpack.c.l.b16 %v2235
    %v2371 = vunpack.c.l.b16 %v2236
    %v2372 = vpack.c.b16 %v2309, %v2308
    %v2373 = vpack.c.b16 %v2311, %v2310
    %v2374 = vpack.c.b16 %v2313, %v2312
    %v2375 = vpack.c.b16 %v2315, %v2314
    %v2376 = vpack.c.b16 %v2317, %v2316
    %v2377 = vpack.c.b16 %v2319, %v2318
    %v2378 = vpack.c.b16 %v2321, %v2320
    %v2379 = vpack.c.b16 %v2323, %v2322
    %v2380 = vpack.c.b16 %v2325, %v2324
    %v2381 = vpack.c.b16 %v2327, %v2326
    %v2382 = vpack.c.b16 %v2329, %v2328
    %v2383 = vpack.c.b16 %v2331, %v2330
    %v2384 = vpack.c.b16 %v2333, %v2332
    %v2385 = vpack.c.b16 %v2335, %v2334
    %v2386 = vpack.c.b16 %v2337, %v2336
    %v2387 = vpack.c.b16 %v2339, %v2338
    %v2388 = vpack.c.b16 %v2341, %v2340
    %v2389 = vpack.c.b16 %v2343, %v2342
    %v2390 = vpack.c.b16 %v2345, %v2344
    %v2391 = vpack.c.b16 %v2347, %v2346
    %v2392 = vpack.c.b16 %v2349, %v2348
    %v2393 = vpack.c.b16 %v2351, %v2350
    %v2394 = vpack.c.b16 %v2353, %v2352
    %v2395 = vpack.c.b16 %v2355, %v2354
    %v2396 = vpack.c.b16 %v2357, %v2356
    %v2397 = vpack.c.b16 %v2359, %v2358
    %v2398 = vpack.c.b16 %v2361, %v2360
    %v2399 = vpack.c.b16 %v2363, %v2362
    %v2400 = vpack.c.b16 %v2365, %v2364
    %v2401 = vpack.c.b16 %v2367, %v2366
    %v2402 = vpack.c.b16 %v2369, %v2368
    %v2403 = vpack.c.b16 %v2371, %v2370
    %2436 = vmatprep.subr.bf16.mxu0 0
    %2437 = vmatpush1.bf16.msra.mxu0 %v2372
    %2438 = vmatprep.subr.bf16.mxu0 0
    %2439 = vmatpush1.bf16.msra.mxu0 %v2373
    %2440 = vmatprep.subr.bf16.mxu0 0
    %2441 = vmatpush1.bf16.msra.mxu0 %v2374
    %2442 = vmatprep.subr.bf16.mxu0 0
    %2443 = vmatpush1.bf16.msra.mxu0 %v2375
    %2444 = vmatprep.subr.bf16.mxu0 0
    %2445 = vmatpush1.bf16.msra.mxu0 %v2376
    %2446 = vmatprep.subr.bf16.mxu0 0
    %2447 = vmatpush1.bf16.msra.mxu0 %v2377
    %2448 = vmatprep.subr.bf16.mxu0 0
    %2449 = vmatpush1.bf16.msra.mxu0 %v2378
    %2450 = vmatprep.subr.bf16.mxu0 0
    %2451 = vmatpush1.bf16.msra.mxu0 %v2379
    %2452 = vmatprep.subr.bf16.mxu0 0
    %2453 = vmatpush1.bf16.msra.mxu0 %v2380
    %2454 = vmatprep.subr.bf16.mxu0 0
    %2455 = vmatpush1.bf16.msra.mxu0 %v2381
    %2456 = vmatprep.subr.bf16.mxu0 0
    %2457 = vmatpush1.bf16.msra.mxu0 %v2382
    %2458 = vmatprep.subr.bf16.mxu0 0
    %2459 = vmatpush1.bf16.msra.mxu0 %v2383
    %2460 = vmatprep.subr.bf16.mxu0 0
    %2461 = vmatpush1.bf16.msra.mxu0 %v2384
    %2462 = vmatprep.subr.bf16.mxu0 0
    %2463 = vmatpush1.bf16.msra.mxu0 %v2385
    %2464 = vmatprep.subr.bf16.mxu0 0
    %2465 = vmatpush1.bf16.msra.mxu0 %v2386
    %2466 = vmatprep.subr.bf16.mxu0 0
    %2467 = vmatpush1.bf16.msra.mxu0 %v2387
    %2468 = vmatprep.mubr.bf16.mxu0 %v2170
    %2469 = vmatmul.mubr.bf16.gmra.mrb[0].mxu0 %v2169
    %v2470 = vpop.f32.mrb[0].mxu0
    %v2471 = vadd.f32 %v2242, %v2470
    %v2472 = vpop.f32.mrb[0].mxu0
    %v2473 = vpop.f32.mrb[0].mxu0
    %v2474 = vpop.f32.mrb[0].mxu0
    %2475 = vdwg.mxu0
    %2476 = vmatprep.subr.bf16.mxu0 0
    %2477 = vmatpush1.bf16.msra.mxu0 %v2388
    %2478 = vmatprep.subr.bf16.mxu0 0
    %2479 = vmatpush1.bf16.msra.mxu0 %v2389
    %2480 = vmatprep.subr.bf16.mxu0 0
    %2481 = vmatpush1.bf16.msra.mxu0 %v2390
    %2482 = vmatprep.subr.bf16.mxu0 0
    %2483 = vmatpush1.bf16.msra.mxu0 %v2391
    %2484 = vmatprep.subr.bf16.mxu0 0
    %2485 = vmatpush1.bf16.msra.mxu0 %v2392
    %2486 = vmatprep.subr.bf16.mxu0 0
    %2487 = vmatpush1.bf16.msra.mxu0 %v2393
    %2488 = vmatprep.subr.bf16.mxu0 0
    %2489 = vmatpush1.bf16.msra.mxu0 %v2394
    %2490 = vmatprep.subr.bf16.mxu0 0
    %2491 = vmatpush1.bf16.msra.mxu0 %v2395
    %2492 = vmatprep.subr.bf16.mxu0 0
    %2493 = vmatpush1.bf16.msra.mxu0 %v2396
    %2494 = vmatprep.subr.bf16.mxu0 0
    %2495 = vmatpush1.bf16.msra.mxu0 %v2397
    %2496 = vmatprep.subr.bf16.mxu0 0
    %2497 = vmatpush1.bf16.msra.mxu0 %v2398
    %2498 = vmatprep.subr.bf16.mxu0 0
    %2499 = vmatpush1.bf16.msra.mxu0 %v2399
    %2500 = vmatprep.subr.bf16.mxu0 0
    %2501 = vmatpush1.bf16.msra.mxu0 %v2400
    %2502 = vmatprep.subr.bf16.mxu0 0
    %2503 = vmatpush1.bf16.msra.mxu0 %v2401
    %2504 = vmatprep.subr.bf16.mxu0 0
    %2505 = vmatpush1.bf16.msra.mxu0 %v2402
    %2506 = vmatprep.subr.bf16.mxu0 0
    %2507 = vmatpush1.bf16.msra.mxu0 %v2403
    %2508 = vmatprep.mubr.bf16.mxu0 %v2172
    %2509 = vmatmul.mubr.bf16.gmra.mrb[0].mxu0 %v2171
    %v2510 = vpop.f32.mrb[0].mxu0
    %v2511 = vadd.f32 %v2471, %v2510
    %v2512 = vpop.f32.mrb[0].mxu0
    %v2513 = vpop.f32.mrb[0].mxu0
    %v2514 = vpop.f32.mrb[0].mxu0
    %2515 = vdwg.mxu0
    %v2516 = vand.u32 2147483647, %v2511
    %vm2517 = vcmp.le.f32.partialorder %v2516, 0.7853982
    %vm2518 = vcmp.lt.s32.totalorder %v2511, 0
    %v2519 = vand.u32 %v2511, 2139095040
    %v2520 = vshrl.u32 %v2519, 23
    %v2521 = vsub.s32 %v2520, 127
    %v2522 = vand.u32 2147483647, %v2511
    %v2523 = vand.u32 %v2522, 8388607
    %v2524 = vor.u32 %v2523, 8388608
    %v2525 = vsub.s32 0, %v2524
    %v2526 = vadd.s32 %v2521, 1
    %vm2527 = vcmp.gt.s32.totalorder %v2526, 0
    %v2528 = vsel %vm2527, %v2526, 0
    %v2529 = vshrl.u32 %v2528, 5
    %v2530 = vand.u32 %v2528, 31
    %v2531 = vsub.s32 32, %v2530
    %v2532 = vshrl.u32 683565275, %v2531
    %v2533 = vshll.u32 683565275, %v2530
    %v2534 = vshrl.u32 2475754826, %v2531
    %v2535 = vor.u32 %v2533, %v2534
    %v2536 = vshll.u32 2475754826, %v2530
    %v2537 = vshrl.u32 2131351028, %v2531
    %v2538 = vor.u32 %v2536, %v2537
    %v2539 = vshll.u32 2131351028, %v2530
    %v2540 = vshrl.u32 2102212464, %v2531
    %v2541 = vor.u32 %v2539, %v2540
    %v2542 = vshll.u32 2102212464, %v2530
    %v2543 = vshrl.u32 920167782, %v2531
    %v2544 = vor.u32 %v2542, %v2543
    %v2545 = vshll.u32 920167782, %v2530
    %v2546 = vshrl.u32 1326507024, %v2531
    %v2547 = vor.u32 %v2545, %v2546
    %vm2548 = vcmp.lt.s32.totalorder %v2529, 1
    %vm2549 = vcmp.lt.s32.totalorder %v2529, 2
    %vm2550 = vcmp.lt.s32.totalorder %v2529, 3
    %vm2551 = vcmp.lt.s32.totalorder %v2529, 4
    %v2552 = vsel %vm2548, %v2532, %v2535
    %v2553 = vsel %vm2551, %v2541, 2102212464
    %v2554 = vsel %vm2550, %v2538, %v2553
    %v2555 = vsel %vm2549, %v2552, %v2554
    %v2556 = vsel %vm2548, %v2535, %v2538
    %v2557 = vsel %vm2551, %v2544, 920167782
    %v2558 = vsel %vm2550, %v2541, %v2557
    %v2559 = vsel %vm2549, %v2556, %v2558
    %v2560 = vsel %vm2548, %v2538, %v2541
    %v2561 = vsel %vm2551, %v2547, 1326507024
    %v2562 = vsel %vm2550, %v2544, %v2561
    %v2563 = vsel %vm2549, %v2560, %v2562
    %v2564 = vshll.u32 %v2524, 8
    %v2565 = vmul.u32.u64.compose %v2564, %v2563
    %v2566 = vextract.low.u32 %v2565
    %v2567 = vextract.high.u32 %v2565
    %v2568 = vmul.u32.u64.compose %v2564, %v2559
    %v2569 = vextract.low.u32 %v2568
    %v2570 = vextract.high.u32 %v2568
    %v2571 = vmul.u32 %v2564, %v2555
    %v2572 = vadd.s32 %v2567, %v2569
    %vm2573 = vc.u32 %v2567, %v2569
    %v2574 = vadd.s32 %v2570, 1
    %v2575 = vsel %vm2573, %v2574, %v2570
    %v2576 = vadd.s32 %v2571, %v2575
    %v2577 = vadd.s32 %v2576, 536870912
    %v2578 = vshrl.u32 %v2577, 30
    %v2579 = vshll.u32 %v2578, 30
    %v2580 = vsub.s32 %v2576, %v2579
    %vm2581 = vcmp.lt.s32.totalorder %v2580, 0
    %v2582 = vsub.s32 0, %v2580
    %v2583 = vsel %vm2581, %v2582, %v2580
    %v2584 = vclz %v2583
    %v2585 = vsub.s32 %v2584, 2
    %vm2586 = vcmp.gt.s32.totalorder 0, %v2585
    %v2587 = vsel %vm2586, 0, %v2585
    %v2588 = vsub.s32 32, %v2587
    %v2589 = vshll.u32 %v2580, %v2587
    %v2590 = vshrl.u32 %v2572, %v2588
    %v2591 = vor.u32 %v2589, %v2590
    %v2592 = vsub.s32 4294967266, %v2587
    %v2593 = vadd.s32 %v2592, 127
    %v2594 = vshll.u32 %v2593, 23
    %v2595 = vor.u32 4788187, %v2594
    %v2596 = vand.u32 2147483647, %v2595
    %v2598 = vcvt.s32.f32 %v2591
    %v2599 = vmul.f32 %v2598, %v2596
    %v2600 = vxor.u32 %v2599, 2147483648
    %v2601 = vsel %vm2518, %v2600, %v2599
    %v2602 = vsub.s32 4, %v2578
    %v2603 = vsel %vm2518, %v2602, %v2578
    %v2604 = vsel %vm2517, %v2511, %v2601
    %v2605 = vsel %vm2517, 0, %v2603
    %v2606 = vcosq.f32.pop %v2604
    %v2607 = vsinq.f32.pop %v2604
    %vm2608 = vweird.f32 %v2511
    %v2609 = vadd.s32 %v2605, 3
    %v2610 = vand.u32 %v2609, 3
    %vm2611 = vcmp.lt.s32.totalorder %v2610, 2
    %vm2612 = vcmp.eq.s32.totalorder %v2610, 0
    %v2613 = vxor.u32 %v2607, 2147483648
    %v2614 = vsel %vm2612, %v2606, %v2613
    %vm2615 = vcmp.eq.s32.totalorder %v2610, 2
    %v2616 = vxor.u32 %v2606, 2147483648
    %v2617 = vsel %vm2615, %v2616, %v2607
    %v2618 = vsel %vm2611, %v2614, %v2617
    %v2619 = vsel %vm2608, nan, %v2618
    %2620 = vst [vmem:[#allocation10] sm:$0xff] %v2619
    // Predicated region
    $region46: #{tpu_custom_call.1} parent=1 // pred_check
      _
    $region47: #{tpu_custom_call.1} parent=1 // pred_check_branch
      %2622 = sbr.rel (0) target = $region49
    $region48: #{tpu_custom_call.1} parent=1 // pred_region
      %s2624 = ssub.s32 128, 128
      %2625 = vsyncadd [#allocation4], %s2624
      %s2627 = sshll.u32 [#allocation10], 4
      %s2628 = int_to_ptr.vmem [resolvable:$true] %s2627
      %2630 = dma.vmem_to_hbm [thread:$0]  %s2628, 128, %s7, [#allocation4]
    $region49: #{tpu_custom_call.1} parent=1 // pred_fallthru
      _
    // Predicated region
    $region50: #{tpu_custom_call.1} parent=1 // pred_check
      _
    $region51: #{tpu_custom_call.1} parent=1 // pred_check_branch
      %2632 = sbr.rel (0) target = $region53
    $region52: #{tpu_custom_call.1} parent=1 // pred_region
      %2633 = dma.done [#allocation4], 128
    $region53: #{tpu_custom_call.1} parent=1 // pred_fallthru
      _
    %2634 = vsyncpa [#allocation3], 1
    %2635 = vsyncpa [#allocation6], 1
    %2636 = vsyncpa [#allocation9], 1
    %2637 = vsyncpa [#allocation4], 1

</llo_original>
